<compile_context>
chip_gen: v7x
topology: tpu7x:2x2x1
jax: 0.10.0
libtpu: 0.0.40
codegen_flags: <defaults>
</compile_context>

<pallas_src>
import jax
import jax.numpy as jnp
import numpy as np
from jax import lax
from jax.experimental import pallas as pl
from jax.experimental.pallas import tpu as pltpu

# ---------------- model hyper-params (small, consistent with the module) ----------------
NUM_WORDS = 50      # vocab size
T = 8               # max_line_len (sequence length)
E = 16              # emb_dim
H = 32              # hidden_dim
B = 2               # real batch size
B_PAD = 8           # batch padded to the f32 sublane count
NUM_CLASSES = 2
LANES = 128         # = 4*H; lane-dense width for the packed params slab / output
NEG = -1e30         # "-inf" for padded logit lanes

# Packed params slab layout (rows, all 128 lanes wide, 8-row aligned sections):
OFF_WIH = 0                      # (E, 128)   W_ih^T, gates permuted [i,f,o,g], g-cols *2
OFF_WHH = OFF_WIH + E            # (H, 128)   W_hh^T, same permutation/scaling
OFF_B = OFF_WHH + H              # (1, 128)   b_ih + b_hh, same permutation/scaling
OFF_WO = OFF_B + 8               # (H, 128)   W_out^T zero-padded to 128 lanes
OFF_BO = OFF_WO + H              # (1, 128)   b_out padded with NEG beyond lane 2
OFF_MASK = OFF_BO + 8            # (T*B_PAD, 128) f32 last-step mask (1.0 where t+1 == len)
P_ROWS = OFF_MASK + T * B_PAD    # 160 rows total (80 KiB)


# ---------------------------------- Pallas kernel ----------------------------------
def lstm_sent_kernel(x_ref, p_ref, out_ref):
    """Whole LSTM forward in one invocation.

    x_ref   : VMEM (T*B_PAD, E)  time-major embedded tokens; rows [t*B_PAD,(t+1)*B_PAD) = step t
    p_ref   : VMEM (P_ROWS, 128) packed params slab (layout above)
    out_ref : VMEM (B_PAD, 128)  softmax probs in lanes [0:2), zeros elsewhere
    """
    wih = p_ref[OFF_WIH:OFF_WIH + E, :]        # (E, 4H)   static slices: free
    whh = p_ref[OFF_WHH:OFF_WHH + H, :]        # (H, 4H)
    bias = p_ref[OFF_B:OFF_B + 1, :]           # (1, 4H)
    wo = p_ref[OFF_WO:OFF_WO + H, :]           # (H, 128)
    bo = p_ref[OFF_BO:OFF_BO + 1, :]           # (1, 128)

    # Hoisted input projection: one matmul covers every timestep.
    gates_x = jnp.dot(x_ref[...], wih,
                      preferred_element_type=jnp.float32) + bias        # (T*B_PAD, 4H)

    h = jnp.zeros((B_PAD, H), jnp.float32)
    c = jnp.zeros((B_PAD, H), jnp.float32)
    hn = jnp.zeros((B_PAD, H), jnp.float32)

    # Fully unrolled recurrence; only h @ W_hh^T sits on the serial critical path.
    # Gate order after wrapper-side permutation: [i, f, o, g] with the g columns of
    # W/bias pre-scaled by 2, so a SINGLE sigmoid sweep covers all four gates:
    #   tanh(g) = 2*sigmoid(2g) - 1
    for t in range(T):
        gates = gates_x[t * B_PAD:(t + 1) * B_PAD, :] + jnp.dot(
            h, whh, preferred_element_type=jnp.float32)                 # (B_PAD, 4H)
        sg = jax.nn.sigmoid(gates)                 # one full-width EUP sweep
        i_g = sg[:, 0 * H:1 * H]
        f_g = sg[:, 1 * H:2 * H]
        o_g = sg[:, 2 * H:3 * H]
        g_g = 2.0 * sg[:, 3 * H:4 * H] - 1.0       # tanh(g) via VPU fixup
        c = f_g * c + i_g * g_g
        tc = 2.0 * jax.nn.sigmoid(c + c) - 1.0     # tanh(c) = 2*sigmoid(2c)-1 (narrow sweep)
        h = o_g * tc
        # pack_padded_sequence + x[x_lengths-1, arange(B)] == hidden at t == length-1
        m = p_ref[OFF_MASK + t * B_PAD:OFF_MASK + (t + 1) * B_PAD, 0:H]  # (B_PAD, H) 0/1
        hn = hn + m * (h - hn)

    h_last = jnp.maximum(hn, 0.0)                                        # ReLU
    # TODO(synk): nn.Dropout() is identity in eval mode; training-mode dropout not modeled.
    # Lane-dense head: padded lanes get logit NEG -> exp underflows to exactly 0.
    logits = jnp.dot(h_last, wo, preferred_element_type=jnp.float32) + bo  # (B_PAD, 128)
    mx = jnp.max(logits, axis=1, keepdims=True)
    e = jnp.exp(logits - mx)
    out_ref[...] = e / jnp.sum(e, axis=1, keepdims=True)


# --------------------------------- wrapper / packing ---------------------------------
def _permute_gates(w):
    """Reorder PyTorch LSTM gate blocks [i,f,g,o] -> [i,f,o,g] and scale g-block by 2."""
    return jnp.concatenate(
        [w[0 * H:1 * H], w[1 * H:2 * H], w[3 * H:4 * H], 2.0 * w[2 * H:3 * H]], axis=0)


def pack_params(params, lengths_padded):
    """Build the single lane-dense (P_ROWS, 128) f32 params slab."""
    wih_p = _permute_gates(params["w_ih"]).T                         # (E, 4H)
    whh_p = _permute_gates(params["w_hh"]).T                         # (H, 4H)
    b_p = _permute_gates(params["b_ih"] + params["b_hh"])[None, :]   # (1, 4H)
    wo_pad = jnp.pad(params["w_out"].T, ((0, 0), (0, LANES - NUM_CLASSES)))      # (H, 128)
    bo_pad = jnp.concatenate(
        [params["b_out"], jnp.full((LANES - NUM_CLASSES,), NEG, jnp.float32)])[None, :]

    # Last-step select mask: mask[t*B_PAD+b, :] = 1.0 iff lengths[b] == t+1.
    steps = jnp.arange(1, T + 1, dtype=jnp.int32)[:, None]           # (T, 1)
    m2 = (steps == lengths_padded[None, :]).astype(jnp.float32)      # (T, B_PAD)
    mask_rows = jnp.broadcast_to(m2.reshape(T * B_PAD, 1), (T * B_PAD, LANES))

    z7 = jnp.zeros((7, LANES), jnp.float32)
    slab = jnp.concatenate(
        [wih_p, whh_p, b_p, z7, wo_pad, bo_pad, z7, mask_rows], axis=0)
    assert slab.shape == (P_ROWS, LANES)
    return slab


def rnn_sent_forward(tokens, lengths, params):
    """tokens: (B, T) int32, lengths: (B,) int32 (sorted descending, as pack_padded requires).

    NOTE: padded batch rows are given length 1 (finite garbage, sliced off); a true
    length of 0 must never reach the kernel.
    """
    b_real = tokens.shape[0]
    pad = B_PAD - b_real

    # Fuse pad + transpose into the embedding gather: pad/transpose the *tokens* (int32),
    # gather once directly into the time-major slab.
    tok_p = jnp.pad(tokens.astype(jnp.int32), ((0, pad), (0, 0)))     # (B_PAD, T), pad idx 0
    tok_tm = jnp.transpose(tok_p, (1, 0)).reshape(T * B_PAD)          # time-major flat
    x2d = params["emb"][tok_tm]                                       # (T*B_PAD, E)

    lens_p = jnp.pad(lengths.astype(jnp.int32), (0, pad), constant_values=1)  # (B_PAD,)
    p_slab = pack_params(params, lens_p)                              # (P_ROWS, 128)

    cost = pl.CostEstimate(
        flops=2 * T * B_PAD * (E + H) * 4 * H + 2 * B_PAD * H * LANES,
        transcendentals=T * B_PAD * (4 * H + H) + B_PAD * LANES,
        bytes_accessed=x2d.size * 4 + p_slab.size * 4 + B_PAD * LANES * 4,
    )

    out = pl.pallas_call(
        lstm_sent_kernel,
        out_shape=jax.ShapeDtypeStruct((B_PAD, LANES), jnp.float32),
        grid_spec=pltpu.PrefetchScalarGridSpec(
            num_scalar_prefetch=0,
            grid=(1,),                          # single invocation: no per-step dispatch
            in_specs=[
                pl.BlockSpec((T * B_PAD, E), lambda i: (0, 0)),       # x slab
                pl.BlockSpec((P_ROWS, LANES), lambda i: (0, 0)),      # packed params slab
            ],
            out_specs=pl.BlockSpec((B_PAD, LANES), lambda i: (0, 0)),
        ),
        compiler_params=pltpu.CompilerParams(dimension_semantics=("arbitrary",)),
        cost_estimate=cost,
    )(x2d, p_slab)
    return out[:b_real, :NUM_CLASSES]


# ------------------------------- pure-JAX reference -------------------------------
def rnn_sent_reference(tokens, lengths, params):
    bsz = tokens.shape[0]
    x = params["emb"][tokens]                        # (B, T, E)
    x_tm = jnp.transpose(x, (1, 0, 2))               # (T, B, E)
    wih_t = params["w_ih"].T
    whh_t = params["w_hh"].T
    b = params["b_ih"] + params["b_hh"]

    def step(carry, x_t):
        h, c = carry
        gates = x_t @ wih_t + h @ whh_t + b
        i = jax.nn.sigmoid(gates[:, 0 * H:1 * H])
        f = jax.nn.sigmoid(gates[:, 1 * H:2 * H])
        g = jnp.tanh(gates[:, 2 * H:3 * H])
        o = jax.nn.sigmoid(gates[:, 3 * H:4 * H])
        c = f * c + i * g
        h = o * jnp.tanh(c)
        return (h, c), h

    init = (jnp.zeros((bsz, H), jnp.float32), jnp.zeros((bsz, H), jnp.float32))
    _, hs = lax.scan(step, init, x_tm)               # (T, B, H)
    h_last = hs[lengths - 1, jnp.arange(bsz), :]     # (B, H)
    h_last = jnp.maximum(h_last, 0.0)
    logits = h_last @ params["w_out"].T + params["b_out"]
    return jax.nn.softmax(logits, axis=1)


# --------------------------------- parameter init ---------------------------------
def init_params(key):
    k_emb, k_wih, k_whh, k_bih, k_bhh, k_wo, k_bo = jax.random.split(key, 7)
    bound = 1.0 / np.sqrt(H)
    emb = jax.random.normal(k_emb, (NUM_WORDS, E), jnp.float32)
    emb = emb.at[0].set(0.0)                                         # padding_idx=0
    params = {
        "emb": emb,
        "w_ih": jax.random.uniform(k_wih, (4 * H, E), jnp.float32, -bound, bound),
        "w_hh": jax.random.uniform(k_whh, (4 * H, H), jnp.float32, -bound, bound),
        "b_ih": jax.random.uniform(k_bih, (4 * H,), jnp.float32, -bound, bound),
        "b_hh": jax.random.uniform(k_bhh, (4 * H,), jnp.float32, -bound, bound),
        "w_out": jax.random.uniform(k_wo, (NUM_CLASSES, H), jnp.float32, -bound, bound),
        "b_out": jax.random.uniform(k_bo, (NUM_CLASSES,), jnp.float32, -bound, bound),
    }
    return params


if __name__ == "__main__":
    key = jax.random.PRNGKey(0)
    params = init_params(key)

    # Padded token batch with descending lengths (pack_padded_sequence contract).
    lengths = jnp.array([T, T - 3], dtype=jnp.int32)                 # [8, 5]
    tok_key = jax.random.fold_in(key, 123)
    tokens = jax.random.randint(tok_key, (B, T), 1, NUM_WORDS, dtype=jnp.int32)
    pos = jnp.arange(T)[None, :]
    tokens = jnp.where(pos < lengths[:, None], tokens, 0)            # pad with index 0

    out = rnn_sent_forward(tokens, lengths, params)
    out = jax.block_until_ready(out)

    ref = jax.block_until_ready(rnn_sent_reference(tokens, lengths, params))
    np.testing.assert_allclose(np.asarray(out), np.asarray(ref), rtol=1e-3, atol=1e-3)
    assert out.shape == (B, NUM_CLASSES)
    np.testing.assert_allclose(np.asarray(out).sum(axis=1), np.ones(B), rtol=1e-5, atol=1e-5)

    print("KERNEL_OK")
</pallas_src>

<mosaic_0001>
module attributes {stable_mosaic.version = 11 : i64} {
  func.func @lstm_sent_kernel(%arg0: i32, %arg1: memref<64x16xf32, #tpu.memory_space<vmem>>, %arg2: memref<160x128xf32, #tpu.memory_space<vmem>>, %arg3: memref<8x128xf32, #tpu.memory_space<vmem>>) attributes {dimension_semantics = [#tpu.dimension_semantics<arbitrary>], iteration_bounds = array<i64: 1>, scalar_prefetch = 0 : i64, scratch_operands = 0 : i64, tpu.core_type = #tpu.core_type<tc>, window_params = [{pipeline_mode = #tpu.pipeline_mode<synchronous>, transform_indices = @transform_0, window_bounds = array<i64: 64, 16>}, {pipeline_mode = #tpu.pipeline_mode<synchronous>, transform_indices = @transform_1, window_bounds = array<i64: 160, 128>}, {pipeline_mode = #tpu.pipeline_mode<synchronous>, transform_indices = @transform_2, window_bounds = array<i64: 8, 128>}]} {
    %c0 = arith.constant 0 : index
    %c0_0 = arith.constant 0 : index
    %0 = vector.load %arg2[%c0, %c0_0] : memref<160x128xf32, #tpu.memory_space<vmem>>, vector<16x128xf32>
    %c16 = arith.constant 16 : index
    %c0_1 = arith.constant 0 : index
    %1 = vector.load %arg2[%c16, %c0_1] : memref<160x128xf32, #tpu.memory_space<vmem>>, vector<32x128xf32>
    %c48 = arith.constant 48 : index
    %c0_2 = arith.constant 0 : index
    %2 = vector.load %arg2[%c48, %c0_2] : memref<160x128xf32, #tpu.memory_space<vmem>>, vector<1x128xf32>
    %c56 = arith.constant 56 : index
    %c0_3 = arith.constant 0 : index
    %3 = vector.load %arg2[%c56, %c0_3] : memref<160x128xf32, #tpu.memory_space<vmem>>, vector<32x128xf32>
    %c88 = arith.constant 88 : index
    %c0_4 = arith.constant 0 : index
    %4 = vector.load %arg2[%c88, %c0_4] : memref<160x128xf32, #tpu.memory_space<vmem>>, vector<1x128xf32>
    %c0_5 = arith.constant 0 : index
    %c0_6 = arith.constant 0 : index
    %5 = vector.load %arg1[%c0_5, %c0_6] : memref<64x16xf32, #tpu.memory_space<vmem>>, vector<64x16xf32>
    %cst = arith.constant dense<0.000000e+00> : vector<64x128xf32>
    %6 = tpu.matmul %5, %0, %cst {dimension_numbers = #tpu.dot_dimension_numbers<[1], [0], [0], [1], [0, 0, 1, 1], [], []>} : vector<64x16xf32>, vector<16x128xf32>, vector<64x128xf32> -> vector<64x128xf32>
    %7 = vector.broadcast %2 : vector<1x128xf32> to vector<64x128xf32>
    %8 = arith.addf %6, %7 : vector<64x128xf32>
    %cst_7 = arith.constant 0.000000e+00 : f32
    %9 = vector.broadcast %cst_7 : f32 to vector<8x32xf32>
    %cst_8 = arith.constant 0.000000e+00 : f32
    %10 = vector.broadcast %cst_8 : f32 to vector<8x32xf32>
    %cst_9 = arith.constant 0.000000e+00 : f32
    %11 = vector.broadcast %cst_9 : f32 to vector<8x32xf32>
    %12 = vector.extract_strided_slice %8 {offsets = [0, 0], sizes = [8, 128], strides = [1, 1]} : vector<64x128xf32> to vector<8x128xf32>
    %cst_10 = arith.constant dense<0.000000e+00> : vector<8x128xf32>
    %13 = tpu.matmul %9, %1, %cst_10 {dimension_numbers = #tpu.dot_dimension_numbers<[1], [0], [0], [1], [0, 0, 1, 1], [], []>} : vector<8x32xf32>, vector<32x128xf32>, vector<8x128xf32> -> vector<8x128xf32>
    %14 = arith.addf %12, %13 : vector<8x128xf32>
    %15 = arith.negf %14 : vector<8x128xf32>
    %16 = math.exp %15 : vector<8x128xf32>
    %cst_11 = arith.constant 1.000000e+00 : f32
    %17 = vector.broadcast %cst_11 : f32 to vector<8x128xf32>
    %18 = arith.addf %17, %16 : vector<8x128xf32>
    %19 = arith.divf %17, %18 : vector<8x128xf32>
    %20 = vector.extract_strided_slice %19 {offsets = [0, 0], sizes = [8, 32], strides = [1, 1]} : vector<8x128xf32> to vector<8x32xf32>
    %21 = vector.extract_strided_slice %19 {offsets = [0, 32], sizes = [8, 32], strides = [1, 1]} : vector<8x128xf32> to vector<8x32xf32>
    %22 = vector.extract_strided_slice %19 {offsets = [0, 64], sizes = [8, 32], strides = [1, 1]} : vector<8x128xf32> to vector<8x32xf32>
    %23 = vector.extract_strided_slice %19 {offsets = [0, 96], sizes = [8, 32], strides = [1, 1]} : vector<8x128xf32> to vector<8x32xf32>
    %cst_12 = arith.constant 2.000000e+00 : f32
    %24 = vector.broadcast %cst_12 : f32 to vector<8x32xf32>
    %25 = arith.mulf %24, %23 : vector<8x32xf32>
    %cst_13 = arith.constant 1.000000e+00 : f32
    %26 = vector.broadcast %cst_13 : f32 to vector<8x32xf32>
    %27 = arith.subf %25, %26 : vector<8x32xf32>
    %28 = arith.mulf %21, %10 : vector<8x32xf32>
    %29 = arith.mulf %20, %27 : vector<8x32xf32>
    %30 = arith.addf %28, %29 : vector<8x32xf32>
    %31 = arith.addf %30, %30 : vector<8x32xf32>
    %32 = arith.negf %31 : vector<8x32xf32>
    %33 = math.exp %32 : vector<8x32xf32>
    %cst_14 = arith.constant 1.000000e+00 : f32
    %34 = vector.broadcast %cst_14 : f32 to vector<8x32xf32>
    %35 = arith.addf %34, %33 : vector<8x32xf32>
    %36 = arith.divf %34, %35 : vector<8x32xf32>
    %cst_15 = arith.constant 2.000000e+00 : f32
    %37 = vector.broadcast %cst_15 : f32 to vector<8x32xf32>
    %38 = arith.mulf %37, %36 : vector<8x32xf32>
    %cst_16 = arith.constant 1.000000e+00 : f32
    %39 = vector.broadcast %cst_16 : f32 to vector<8x32xf32>
    %40 = arith.subf %38, %39 : vector<8x32xf32>
    %41 = arith.mulf %22, %40 : vector<8x32xf32>
    %c96 = arith.constant 96 : index
    %c0_17 = arith.constant 0 : index
    %42 = vector.load %arg2[%c96, %c0_17] : memref<160x128xf32, #tpu.memory_space<vmem>>, vector<8x32xf32>
    %43 = arith.subf %41, %11 : vector<8x32xf32>
    %44 = arith.mulf %42, %43 : vector<8x32xf32>
    %45 = arith.addf %11, %44 : vector<8x32xf32>
    %46 = vector.extract_strided_slice %8 {offsets = [8, 0], sizes = [8, 128], strides = [1, 1]} : vector<64x128xf32> to vector<8x128xf32>
    %cst_18 = arith.constant dense<0.000000e+00> : vector<8x128xf32>
    %47 = tpu.matmul %41, %1, %cst_18 {dimension_numbers = #tpu.dot_dimension_numbers<[1], [0], [0], [1], [0, 0, 1, 1], [], []>} : vector<8x32xf32>, vector<32x128xf32>, vector<8x128xf32> -> vector<8x128xf32>
    %48 = arith.addf %46, %47 : vector<8x128xf32>
    %49 = arith.negf %48 : vector<8x128xf32>
    %50 = math.exp %49 : vector<8x128xf32>
    %cst_19 = arith.constant 1.000000e+00 : f32
    %51 = vector.broadcast %cst_19 : f32 to vector<8x128xf32>
    %52 = arith.addf %51, %50 : vector<8x128xf32>
    %53 = arith.divf %51, %52 : vector<8x128xf32>
    %54 = vector.extract_strided_slice %53 {offsets = [0, 0], sizes = [8, 32], strides = [1, 1]} : vector<8x128xf32> to vector<8x32xf32>
    %55 = vector.extract_strided_slice %53 {offsets = [0, 32], sizes = [8, 32], strides = [1, 1]} : vector<8x128xf32> to vector<8x32xf32>
    %56 = vector.extract_strided_slice %53 {offsets = [0, 64], sizes = [8, 32], strides = [1, 1]} : vector<8x128xf32> to vector<8x32xf32>
    %57 = vector.extract_strided_slice %53 {offsets = [0, 96], sizes = [8, 32], strides = [1, 1]} : vector<8x128xf32> to vector<8x32xf32>
    %cst_20 = arith.constant 2.000000e+00 : f32
    %58 = vector.broadcast %cst_20 : f32 to vector<8x32xf32>
    %59 = arith.mulf %58, %57 : vector<8x32xf32>
    %cst_21 = arith.constant 1.000000e+00 : f32
    %60 = vector.broadcast %cst_21 : f32 to vector<8x32xf32>
    %61 = arith.subf %59, %60 : vector<8x32xf32>
    %62 = arith.mulf %55, %30 : vector<8x32xf32>
    %63 = arith.mulf %54, %61 : vector<8x32xf32>
    %64 = arith.addf %62, %63 : vector<8x32xf32>
    %65 = arith.addf %64, %64 : vector<8x32xf32>
    %66 = arith.negf %65 : vector<8x32xf32>
    %67 = math.exp %66 : vector<8x32xf32>
    %cst_22 = arith.constant 1.000000e+00 : f32
    %68 = vector.broadcast %cst_22 : f32 to vector<8x32xf32>
    %69 = arith.addf %68, %67 : vector<8x32xf32>
    %70 = arith.divf %68, %69 : vector<8x32xf32>
    %cst_23 = arith.constant 2.000000e+00 : f32
    %71 = vector.broadcast %cst_23 : f32 to vector<8x32xf32>
    %72 = arith.mulf %71, %70 : vector<8x32xf32>
    %cst_24 = arith.constant 1.000000e+00 : f32
    %73 = vector.broadcast %cst_24 : f32 to vector<8x32xf32>
    %74 = arith.subf %72, %73 : vector<8x32xf32>
    %75 = arith.mulf %56, %74 : vector<8x32xf32>
    %c104 = arith.constant 104 : index
    %c0_25 = arith.constant 0 : index
    %76 = vector.load %arg2[%c104, %c0_25] : memref<160x128xf32, #tpu.memory_space<vmem>>, vector<8x32xf32>
    %77 = arith.subf %75, %45 : vector<8x32xf32>
    %78 = arith.mulf %76, %77 : vector<8x32xf32>
    %79 = arith.addf %45, %78 : vector<8x32xf32>
    %80 = vector.extract_strided_slice %8 {offsets = [16, 0], sizes = [8, 128], strides = [1, 1]} : vector<64x128xf32> to vector<8x128xf32>
    %cst_26 = arith.constant dense<0.000000e+00> : vector<8x128xf32>
    %81 = tpu.matmul %75, %1, %cst_26 {dimension_numbers = #tpu.dot_dimension_numbers<[1], [0], [0], [1], [0, 0, 1, 1], [], []>} : vector<8x32xf32>, vector<32x128xf32>, vector<8x128xf32> -> vector<8x128xf32>
    %82 = arith.addf %80, %81 : vector<8x128xf32>
    %83 = arith.negf %82 : vector<8x128xf32>
    %84 = math.exp %83 : vector<8x128xf32>
    %cst_27 = arith.constant 1.000000e+00 : f32
    %85 = vector.broadcast %cst_27 : f32 to vector<8x128xf32>
    %86 = arith.addf %85, %84 : vector<8x128xf32>
    %87 = arith.divf %85, %86 : vector<8x128xf32>
    %88 = vector.extract_strided_slice %87 {offsets = [0, 0], sizes = [8, 32], strides = [1, 1]} : vector<8x128xf32> to vector<8x32xf32>
    %89 = vector.extract_strided_slice %87 {offsets = [0, 32], sizes = [8, 32], strides = [1, 1]} : vector<8x128xf32> to vector<8x32xf32>
    %90 = vector.extract_strided_slice %87 {offsets = [0, 64], sizes = [8, 32], strides = [1, 1]} : vector<8x128xf32> to vector<8x32xf32>
    %91 = vector.extract_strided_slice %87 {offsets = [0, 96], sizes = [8, 32], strides = [1, 1]} : vector<8x128xf32> to vector<8x32xf32>
    %cst_28 = arith.constant 2.000000e+00 : f32
    %92 = vector.broadcast %cst_28 : f32 to vector<8x32xf32>
    %93 = arith.mulf %92, %91 : vector<8x32xf32>
    %cst_29 = arith.constant 1.000000e+00 : f32
    %94 = vector.broadcast %cst_29 : f32 to vector<8x32xf32>
    %95 = arith.subf %93, %94 : vector<8x32xf32>
    %96 = arith.mulf %89, %64 : vector<8x32xf32>
    %97 = arith.mulf %88, %95 : vector<8x32xf32>
    %98 = arith.addf %96, %97 : vector<8x32xf32>
    %99 = arith.addf %98, %98 : vector<8x32xf32>
    %100 = arith.negf %99 : vector<8x32xf32>
    %101 = math.exp %100 : vector<8x32xf32>
    %cst_30 = arith.constant 1.000000e+00 : f32
    %102 = vector.broadcast %cst_30 : f32 to vector<8x32xf32>
    %103 = arith.addf %102, %101 : vector<8x32xf32>
    %104 = arith.divf %102, %103 : vector<8x32xf32>
    %cst_31 = arith.constant 2.000000e+00 : f32
    %105 = vector.broadcast %cst_31 : f32 to vector<8x32xf32>
    %106 = arith.mulf %105, %104 : vector<8x32xf32>
    %cst_32 = arith.constant 1.000000e+00 : f32
    %107 = vector.broadcast %cst_32 : f32 to vector<8x32xf32>
    %108 = arith.subf %106, %107 : vector<8x32xf32>
    %109 = arith.mulf %90, %108 : vector<8x32xf32>
    %c112 = arith.constant 112 : index
    %c0_33 = arith.constant 0 : index
    %110 = vector.load %arg2[%c112, %c0_33] : memref<160x128xf32, #tpu.memory_space<vmem>>, vector<8x32xf32>
    %111 = arith.subf %109, %79 : vector<8x32xf32>
    %112 = arith.mulf %110, %111 : vector<8x32xf32>
    %113 = arith.addf %79, %112 : vector<8x32xf32>
    %114 = vector.extract_strided_slice %8 {offsets = [24, 0], sizes = [8, 128], strides = [1, 1]} : vector<64x128xf32> to vector<8x128xf32>
    %cst_34 = arith.constant dense<0.000000e+00> : vector<8x128xf32>
    %115 = tpu.matmul %109, %1, %cst_34 {dimension_numbers = #tpu.dot_dimension_numbers<[1], [0], [0], [1], [0, 0, 1, 1], [], []>} : vector<8x32xf32>, vector<32x128xf32>, vector<8x128xf32> -> vector<8x128xf32>
    %116 = arith.addf %114, %115 : vector<8x128xf32>
    %117 = arith.negf %116 : vector<8x128xf32>
    %118 = math.exp %117 : vector<8x128xf32>
    %cst_35 = arith.constant 1.000000e+00 : f32
    %119 = vector.broadcast %cst_35 : f32 to vector<8x128xf32>
    %120 = arith.addf %119, %118 : vector<8x128xf32>
    %121 = arith.divf %119, %120 : vector<8x128xf32>
    %122 = vector.extract_strided_slice %121 {offsets = [0, 0], sizes = [8, 32], strides = [1, 1]} : vector<8x128xf32> to vector<8x32xf32>
    %123 = vector.extract_strided_slice %121 {offsets = [0, 32], sizes = [8, 32], strides = [1, 1]} : vector<8x128xf32> to vector<8x32xf32>
    %124 = vector.extract_strided_slice %121 {offsets = [0, 64], sizes = [8, 32], strides = [1, 1]} : vector<8x128xf32> to vector<8x32xf32>
    %125 = vector.extract_strided_slice %121 {offsets = [0, 96], sizes = [8, 32], strides = [1, 1]} : vector<8x128xf32> to vector<8x32xf32>
    %cst_36 = arith.constant 2.000000e+00 : f32
    %126 = vector.broadcast %cst_36 : f32 to vector<8x32xf32>
    %127 = arith.mulf %126, %125 : vector<8x32xf32>
    %cst_37 = arith.constant 1.000000e+00 : f32
    %128 = vector.broadcast %cst_37 : f32 to vector<8x32xf32>
    %129 = arith.subf %127, %128 : vector<8x32xf32>
    %130 = arith.mulf %123, %98 : vector<8x32xf32>
    %131 = arith.mulf %122, %129 : vector<8x32xf32>
    %132 = arith.addf %130, %131 : vector<8x32xf32>
    %133 = arith.addf %132, %132 : vector<8x32xf32>
    %134 = arith.negf %133 : vector<8x32xf32>
    %135 = math.exp %134 : vector<8x32xf32>
    %cst_38 = arith.constant 1.000000e+00 : f32
    %136 = vector.broadcast %cst_38 : f32 to vector<8x32xf32>
    %137 = arith.addf %136, %135 : vector<8x32xf32>
    %138 = arith.divf %136, %137 : vector<8x32xf32>
    %cst_39 = arith.constant 2.000000e+00 : f32
    %139 = vector.broadcast %cst_39 : f32 to vector<8x32xf32>
    %140 = arith.mulf %139, %138 : vector<8x32xf32>
    %cst_40 = arith.constant 1.000000e+00 : f32
    %141 = vector.broadcast %cst_40 : f32 to vector<8x32xf32>
    %142 = arith.subf %140, %141 : vector<8x32xf32>
    %143 = arith.mulf %124, %142 : vector<8x32xf32>
    %c120 = arith.constant 120 : index
    %c0_41 = arith.constant 0 : index
    %144 = vector.load %arg2[%c120, %c0_41] : memref<160x128xf32, #tpu.memory_space<vmem>>, vector<8x32xf32>
    %145 = arith.subf %143, %113 : vector<8x32xf32>
    %146 = arith.mulf %144, %145 : vector<8x32xf32>
    %147 = arith.addf %113, %146 : vector<8x32xf32>
    %148 = vector.extract_strided_slice %8 {offsets = [32, 0], sizes = [8, 128], strides = [1, 1]} : vector<64x128xf32> to vector<8x128xf32>
    %cst_42 = arith.constant dense<0.000000e+00> : vector<8x128xf32>
    %149 = tpu.matmul %143, %1, %cst_42 {dimension_numbers = #tpu.dot_dimension_numbers<[1], [0], [0], [1], [0, 0, 1, 1], [], []>} : vector<8x32xf32>, vector<32x128xf32>, vector<8x128xf32> -> vector<8x128xf32>
    %150 = arith.addf %148, %149 : vector<8x128xf32>
    %151 = arith.negf %150 : vector<8x128xf32>
    %152 = math.exp %151 : vector<8x128xf32>
    %cst_43 = arith.constant 1.000000e+00 : f32
    %153 = vector.broadcast %cst_43 : f32 to vector<8x128xf32>
    %154 = arith.addf %153, %152 : vector<8x128xf32>
    %155 = arith.divf %153, %154 : vector<8x128xf32>
    %156 = vector.extract_strided_slice %155 {offsets = [0, 0], sizes = [8, 32], strides = [1, 1]} : vector<8x128xf32> to vector<8x32xf32>
    %157 = vector.extract_strided_slice %155 {offsets = [0, 32], sizes = [8, 32], strides = [1, 1]} : vector<8x128xf32> to vector<8x32xf32>
    %158 = vector.extract_strided_slice %155 {offsets = [0, 64], sizes = [8, 32], strides = [1, 1]} : vector<8x128xf32> to vector<8x32xf32>
    %159 = vector.extract_strided_slice %155 {offsets = [0, 96], sizes = [8, 32], strides = [1, 1]} : vector<8x128xf32> to vector<8x32xf32>
    %cst_44 = arith.constant 2.000000e+00 : f32
    %160 = vector.broadcast %cst_44 : f32 to vector<8x32xf32>
    %161 = arith.mulf %160, %159 : vector<8x32xf32>
    %cst_45 = arith.constant 1.000000e+00 : f32
    %162 = vector.broadcast %cst_45 : f32 to vector<8x32xf32>
    %163 = arith.subf %161, %162 : vector<8x32xf32>
    %164 = arith.mulf %157, %132 : vector<8x32xf32>
    %165 = arith.mulf %156, %163 : vector<8x32xf32>
    %166 = arith.addf %164, %165 : vector<8x32xf32>
    %167 = arith.addf %166, %166 : vector<8x32xf32>
    %168 = arith.negf %167 : vector<8x32xf32>
    %169 = math.exp %168 : vector<8x32xf32>
    %cst_46 = arith.constant 1.000000e+00 : f32
    %170 = vector.broadcast %cst_46 : f32 to vector<8x32xf32>
    %171 = arith.addf %170, %169 : vector<8x32xf32>
    %172 = arith.divf %170, %171 : vector<8x32xf32>
    %cst_47 = arith.constant 2.000000e+00 : f32
    %173 = vector.broadcast %cst_47 : f32 to vector<8x32xf32>
    %174 = arith.mulf %173, %172 : vector<8x32xf32>
    %cst_48 = arith.constant 1.000000e+00 : f32
    %175 = vector.broadcast %cst_48 : f32 to vector<8x32xf32>
    %176 = arith.subf %174, %175 : vector<8x32xf32>
    %177 = arith.mulf %158, %176 : vector<8x32xf32>
    %c128 = arith.constant 128 : index
    %c0_49 = arith.constant 0 : index
    %178 = vector.load %arg2[%c128, %c0_49] : memref<160x128xf32, #tpu.memory_space<vmem>>, vector<8x32xf32>
    %179 = arith.subf %177, %147 : vector<8x32xf32>
    %180 = arith.mulf %178, %179 : vector<8x32xf32>
    %181 = arith.addf %147, %180 : vector<8x32xf32>
    %182 = vector.extract_strided_slice %8 {offsets = [40, 0], sizes = [8, 128], strides = [1, 1]} : vector<64x128xf32> to vector<8x128xf32>
    %cst_50 = arith.constant dense<0.000000e+00> : vector<8x128xf32>
    %183 = tpu.matmul %177, %1, %cst_50 {dimension_numbers = #tpu.dot_dimension_numbers<[1], [0], [0], [1], [0, 0, 1, 1], [], []>} : vector<8x32xf32>, vector<32x128xf32>, vector<8x128xf32> -> vector<8x128xf32>
    %184 = arith.addf %182, %183 : vector<8x128xf32>
    %185 = arith.negf %184 : vector<8x128xf32>
    %186 = math.exp %185 : vector<8x128xf32>
    %cst_51 = arith.constant 1.000000e+00 : f32
    %187 = vector.broadcast %cst_51 : f32 to vector<8x128xf32>
    %188 = arith.addf %187, %186 : vector<8x128xf32>
    %189 = arith.divf %187, %188 : vector<8x128xf32>
    %190 = vector.extract_strided_slice %189 {offsets = [0, 0], sizes = [8, 32], strides = [1, 1]} : vector<8x128xf32> to vector<8x32xf32>
    %191 = vector.extract_strided_slice %189 {offsets = [0, 32], sizes = [8, 32], strides = [1, 1]} : vector<8x128xf32> to vector<8x32xf32>
    %192 = vector.extract_strided_slice %189 {offsets = [0, 64], sizes = [8, 32], strides = [1, 1]} : vector<8x128xf32> to vector<8x32xf32>
    %193 = vector.extract_strided_slice %189 {offsets = [0, 96], sizes = [8, 32], strides = [1, 1]} : vector<8x128xf32> to vector<8x32xf32>
    %cst_52 = arith.constant 2.000000e+00 : f32
    %194 = vector.broadcast %cst_52 : f32 to vector<8x32xf32>
    %195 = arith.mulf %194, %193 : vector<8x32xf32>
    %cst_53 = arith.constant 1.000000e+00 : f32
    %196 = vector.broadcast %cst_53 : f32 to vector<8x32xf32>
    %197 = arith.subf %195, %196 : vector<8x32xf32>
    %198 = arith.mulf %191, %166 : vector<8x32xf32>
    %199 = arith.mulf %190, %197 : vector<8x32xf32>
    %200 = arith.addf %198, %199 : vector<8x32xf32>
    %201 = arith.addf %200, %200 : vector<8x32xf32>
    %202 = arith.negf %201 : vector<8x32xf32>
    %203 = math.exp %202 : vector<8x32xf32>
    %cst_54 = arith.constant 1.000000e+00 : f32
    %204 = vector.broadcast %cst_54 : f32 to vector<8x32xf32>
    %205 = arith.addf %204, %203 : vector<8x32xf32>
    %206 = arith.divf %204, %205 : vector<8x32xf32>
    %cst_55 = arith.constant 2.000000e+00 : f32
    %207 = vector.broadcast %cst_55 : f32 to vector<8x32xf32>
    %208 = arith.mulf %207, %206 : vector<8x32xf32>
    %cst_56 = arith.constant 1.000000e+00 : f32
    %209 = vector.broadcast %cst_56 : f32 to vector<8x32xf32>
    %210 = arith.subf %208, %209 : vector<8x32xf32>
    %211 = arith.mulf %192, %210 : vector<8x32xf32>
    %c136 = arith.constant 136 : index
    %c0_57 = arith.constant 0 : index
    %212 = vector.load %arg2[%c136, %c0_57] : memref<160x128xf32, #tpu.memory_space<vmem>>, vector<8x32xf32>
    %213 = arith.subf %211, %181 : vector<8x32xf32>
    %214 = arith.mulf %212, %213 : vector<8x32xf32>
    %215 = arith.addf %181, %214 : vector<8x32xf32>
    %216 = vector.extract_strided_slice %8 {offsets = [48, 0], sizes = [8, 128], strides = [1, 1]} : vector<64x128xf32> to vector<8x128xf32>
    %cst_58 = arith.constant dense<0.000000e+00> : vector<8x128xf32>
    %217 = tpu.matmul %211, %1, %cst_58 {dimension_numbers = #tpu.dot_dimension_numbers<[1], [0], [0], [1], [0, 0, 1, 1], [], []>} : vector<8x32xf32>, vector<32x128xf32>, vector<8x128xf32> -> vector<8x128xf32>
    %218 = arith.addf %216, %217 : vector<8x128xf32>
    %219 = arith.negf %218 : vector<8x128xf32>
    %220 = math.exp %219 : vector<8x128xf32>
    %cst_59 = arith.constant 1.000000e+00 : f32
    %221 = vector.broadcast %cst_59 : f32 to vector<8x128xf32>
    %222 = arith.addf %221, %220 : vector<8x128xf32>
    %223 = arith.divf %221, %222 : vector<8x128xf32>
    %224 = vector.extract_strided_slice %223 {offsets = [0, 0], sizes = [8, 32], strides = [1, 1]} : vector<8x128xf32> to vector<8x32xf32>
    %225 = vector.extract_strided_slice %223 {offsets = [0, 32], sizes = [8, 32], strides = [1, 1]} : vector<8x128xf32> to vector<8x32xf32>
    %226 = vector.extract_strided_slice %223 {offsets = [0, 64], sizes = [8, 32], strides = [1, 1]} : vector<8x128xf32> to vector<8x32xf32>
    %227 = vector.extract_strided_slice %223 {offsets = [0, 96], sizes = [8, 32], strides = [1, 1]} : vector<8x128xf32> to vector<8x32xf32>
    %cst_60 = arith.constant 2.000000e+00 : f32
    %228 = vector.broadcast %cst_60 : f32 to vector<8x32xf32>
    %229 = arith.mulf %228, %227 : vector<8x32xf32>
    %cst_61 = arith.constant 1.000000e+00 : f32
    %230 = vector.broadcast %cst_61 : f32 to vector<8x32xf32>
    %231 = arith.subf %229, %230 : vector<8x32xf32>
    %232 = arith.mulf %225, %200 : vector<8x32xf32>
    %233 = arith.mulf %224, %231 : vector<8x32xf32>
    %234 = arith.addf %232, %233 : vector<8x32xf32>
    %235 = arith.addf %234, %234 : vector<8x32xf32>
    %236 = arith.negf %235 : vector<8x32xf32>
    %237 = math.exp %236 : vector<8x32xf32>
    %cst_62 = arith.constant 1.000000e+00 : f32
    %238 = vector.broadcast %cst_62 : f32 to vector<8x32xf32>
    %239 = arith.addf %238, %237 : vector<8x32xf32>
    %240 = arith.divf %238, %239 : vector<8x32xf32>
    %cst_63 = arith.constant 2.000000e+00 : f32
    %241 = vector.broadcast %cst_63 : f32 to vector<8x32xf32>
    %242 = arith.mulf %241, %240 : vector<8x32xf32>
    %cst_64 = arith.constant 1.000000e+00 : f32
    %243 = vector.broadcast %cst_64 : f32 to vector<8x32xf32>
    %244 = arith.subf %242, %243 : vector<8x32xf32>
    %245 = arith.mulf %226, %244 : vector<8x32xf32>
    %c144 = arith.constant 144 : index
    %c0_65 = arith.constant 0 : index
    %246 = vector.load %arg2[%c144, %c0_65] : memref<160x128xf32, #tpu.memory_space<vmem>>, vector<8x32xf32>
    %247 = arith.subf %245, %215 : vector<8x32xf32>
    %248 = arith.mulf %246, %247 : vector<8x32xf32>
    %249 = arith.addf %215, %248 : vector<8x32xf32>
    %250 = vector.extract_strided_slice %8 {offsets = [56, 0], sizes = [8, 128], strides = [1, 1]} : vector<64x128xf32> to vector<8x128xf32>
    %cst_66 = arith.constant dense<0.000000e+00> : vector<8x128xf32>
    %251 = tpu.matmul %245, %1, %cst_66 {dimension_numbers = #tpu.dot_dimension_numbers<[1], [0], [0], [1], [0, 0, 1, 1], [], []>} : vector<8x32xf32>, vector<32x128xf32>, vector<8x128xf32> -> vector<8x128xf32>
    %252 = arith.addf %250, %251 : vector<8x128xf32>
    %253 = arith.negf %252 : vector<8x128xf32>
    %254 = math.exp %253 : vector<8x128xf32>
    %cst_67 = arith.constant 1.000000e+00 : f32
    %255 = vector.broadcast %cst_67 : f32 to vector<8x128xf32>
    %256 = arith.addf %255, %254 : vector<8x128xf32>
    %257 = arith.divf %255, %256 : vector<8x128xf32>
    %258 = vector.extract_strided_slice %257 {offsets = [0, 0], sizes = [8, 32], strides = [1, 1]} : vector<8x128xf32> to vector<8x32xf32>
    %259 = vector.extract_strided_slice %257 {offsets = [0, 32], sizes = [8, 32], strides = [1, 1]} : vector<8x128xf32> to vector<8x32xf32>
    %260 = vector.extract_strided_slice %257 {offsets = [0, 64], sizes = [8, 32], strides = [1, 1]} : vector<8x128xf32> to vector<8x32xf32>
    %261 = vector.extract_strided_slice %257 {offsets = [0, 96], sizes = [8, 32], strides = [1, 1]} : vector<8x128xf32> to vector<8x32xf32>
    %cst_68 = arith.constant 2.000000e+00 : f32
    %262 = vector.broadcast %cst_68 : f32 to vector<8x32xf32>
    %263 = arith.mulf %262, %261 : vector<8x32xf32>
    %cst_69 = arith.constant 1.000000e+00 : f32
    %264 = vector.broadcast %cst_69 : f32 to vector<8x32xf32>
    %265 = arith.subf %263, %264 : vector<8x32xf32>
    %266 = arith.mulf %259, %234 : vector<8x32xf32>
    %267 = arith.mulf %258, %265 : vector<8x32xf32>
    %268 = arith.addf %266, %267 : vector<8x32xf32>
    %269 = arith.addf %268, %268 : vector<8x32xf32>
    %270 = arith.negf %269 : vector<8x32xf32>
    %271 = math.exp %270 : vector<8x32xf32>
    %cst_70 = arith.constant 1.000000e+00 : f32
    %272 = vector.broadcast %cst_70 : f32 to vector<8x32xf32>
    %273 = arith.addf %272, %271 : vector<8x32xf32>
    %274 = arith.divf %272, %273 : vector<8x32xf32>
    %cst_71 = arith.constant 2.000000e+00 : f32
    %275 = vector.broadcast %cst_71 : f32 to vector<8x32xf32>
    %276 = arith.mulf %275, %274 : vector<8x32xf32>
    %cst_72 = arith.constant 1.000000e+00 : f32
    %277 = vector.broadcast %cst_72 : f32 to vector<8x32xf32>
    %278 = arith.subf %276, %277 : vector<8x32xf32>
    %279 = arith.mulf %260, %278 : vector<8x32xf32>
    %c152 = arith.constant 152 : index
    %c0_73 = arith.constant 0 : index
    %280 = vector.load %arg2[%c152, %c0_73] : memref<160x128xf32, #tpu.memory_space<vmem>>, vector<8x32xf32>
    %281 = arith.subf %279, %249 : vector<8x32xf32>
    %282 = arith.mulf %280, %281 : vector<8x32xf32>
    %283 = arith.addf %249, %282 : vector<8x32xf32>
    %cst_74 = arith.constant 0.000000e+00 : f32
    %284 = vector.broadcast %cst_74 : f32 to vector<8x32xf32>
    %285 = arith.maximumf %283, %284 : vector<8x32xf32>
    %cst_75 = arith.constant dense<0.000000e+00> : vector<8x128xf32>
    %286 = tpu.matmul %285, %3, %cst_75 {dimension_numbers = #tpu.dot_dimension_numbers<[1], [0], [0], [1], [0, 0, 1, 1], [], []>} : vector<8x32xf32>, vector<32x128xf32>, vector<8x128xf32> -> vector<8x128xf32>
    %287 = vector.broadcast %4 : vector<1x128xf32> to vector<8x128xf32>
    %288 = arith.addf %286, %287 : vector<8x128xf32>
    %cst_76 = arith.constant dense<0xFF800000> : vector<8xf32>
    %289 = vector.multi_reduction <maximumf>, %288, %cst_76 [1] : vector<8x128xf32> to vector<8xf32>
    %290 = vector.shape_cast %289 : vector<8xf32> to vector<8x1xf32>
    %291 = vector.broadcast %290 : vector<8x1xf32> to vector<8x128xf32>
    %292 = arith.subf %288, %291 : vector<8x128xf32>
    %293 = math.exp %292 : vector<8x128xf32>
    %cst_77 = arith.constant dense<0.000000e+00> : vector<8xf32>
    %294 = vector.multi_reduction <add>, %293, %cst_77 [1] : vector<8x128xf32> to vector<8xf32>
    %295 = vector.shape_cast %294 : vector<8xf32> to vector<8x1xf32>
    %296 = vector.broadcast %295 : vector<8x1xf32> to vector<8x128xf32>
    %297 = arith.divf %293, %296 : vector<8x128xf32>
    %c0_78 = arith.constant 0 : index
    %c0_79 = arith.constant 0 : index
    %298 = vector.load %arg3[%c0_78, %c0_79] : memref<8x128xf32, #tpu.memory_space<vmem>>, vector<8x128xf32>
    tpu.vector_store %arg3[%c0_78, %c0_79], %297 {strides = array<i32>} : memref<8x128xf32, #tpu.memory_space<vmem>>, vector<8x128xf32>,
    return
  }
  func.func @transform_0(%arg0: i32) -> (i32, i32) {
    %c0_i32 = arith.constant 0 : i32
    %c0_i32_0 = arith.constant 0 : i32
    %c0_i32_1 = arith.constant 0 : i32
    return %c0_i32, %c0_i32_0 : i32, i32
  }
  func.func @transform_1(%arg0: i32) -> (i32, i32) {
    %c0_i32 = arith.constant 0 : i32
    %c0_i32_0 = arith.constant 0 : i32
    %c0_i32_1 = arith.constant 0 : i32
    return %c0_i32, %c0_i32_0 : i32, i32
  }
  func.func @transform_2(%arg0: i32) -> (i32, i32) {
    %c0_i32 = arith.constant 0 : i32
    %c0_i32_0 = arith.constant 0 : i32
    %c0_i32_1 = arith.constant 0 : i32
    return %c0_i32, %c0_i32_0 : i32, i32
  }
}

</mosaic_0001>

<llo_original>
// kernel: tpu_custom_call.1
$region0: #{tpu_custom_call.1}
  #allocation0 [shape = 'u32[]', space=smem, size = 0x4, offset = 0x4, fixed_abs, tag = 'smem constant byte address 0x4 - core index']
  #allocation1 [shape = 'u32[144,128]{1,0:T(1,128)}', space=vmem, size = 0x12000, scoped, tag = 'internal scratch']
  %s0 = inlined_call_operand.vmem [shape: f32[64,16], index: 0, kind: input, shape index: {}]
  %s1 = inlined_call_operand.hbm [shape: f32[160,128], index: 1, kind: input, shape index: {}]
  %s2 = inlined_call_operand.hbm [shape: f32[8,128], index: 2, kind: output, shape index: {}]
  %s3 = sld [smem:[#allocation0]]
  $region22: #{tpu_custom_call.1} parent=0
    _
  %s5 = ssub.s32 1, %s3
  %s6 = scalar_select 0, %s5, %s3
  $region1: #{tpu_custom_call.1} parent=0
    #allocation2 [shape = 'u8[81920]{0}', space=vmem, size = 0x14000, scoped, tag = 'input window, operand 1, single buffered']
    #allocation3 [shape = 's32[1]{0}', space=sflag, size = 0x4, scoped, tag = 'scoped memory for tpu_custom_call.1']
    #allocation4 [shape = 's32[1]{0}', space=sflag, size = 0x4, scoped, tag = 'scoped memory for tpu_custom_call.1']
    #allocation5 [shape = 'u8[4096]{0}', space=vmem, size = 0x1000, scoped, tag = 'output window, operand 0, single buffered']
    %7 = vsyncpa [#allocation3], 0
    %8 = vsyncpa [#allocation4], 0
    // Predicated region
    $region2: #{tpu_custom_call.1} parent=1 // pred_check
      _
    $region3: #{tpu_custom_call.1} parent=1 // pred_check_branch
      %10 = sbr.rel (0) target = $region5
    $region4: #{tpu_custom_call.1} parent=1 // pred_region
      _
    $region5: #{tpu_custom_call.1} parent=1 // pred_fallthru
      _
    // Predicated region
    $region6: #{tpu_custom_call.1} parent=1 // pred_check
      _
    $region7: #{tpu_custom_call.1} parent=1 // pred_check_branch
      %12 = sbr.rel (0) target = $region9
    $region8: #{tpu_custom_call.1} parent=1 // pred_region
      %s14 = ssub.s32 2560, 2560
      %15 = vsyncadd [#allocation3], %s14
      %s16 = sshll.u32 [#allocation2], 4
      %s17 = int_to_ptr.vmem [resolvable:$true] %s16
      %22 = dma.hbm_to_vmem [thread:$0]  %s1, 2560, %s17, [#allocation3], 128, 128, 8
    $region9: #{tpu_custom_call.1} parent=1 // pred_fallthru
      _
    // Predicated region
    $region10: #{tpu_custom_call.1} parent=1 // pred_check
      _
    $region11: #{tpu_custom_call.1} parent=1 // pred_check_branch
      %24 = sbr.rel (0) target = $region13
    $region12: #{tpu_custom_call.1} parent=1 // pred_region
      %25 = dma.done [#allocation3], 2560
    $region13: #{tpu_custom_call.1} parent=1 // pred_fallthru
      _
    %v26 = vld [vmem:[#allocation2] sm:$0xff]
    %v27 = vld [vmem:[#allocation2 + $0x8] sm:$0xff]
    %v28 = vld [vmem:[#allocation2 + $0x10] sm:$0xff]
    %v29 = vld [vmem:[#allocation2 + $0x18] sm:$0xff]
    %v30 = vld [vmem:[#allocation2 + $0x20] sm:$0xff]
    %v31 = vld [vmem:[#allocation2 + $0x28] sm:$0xff]
    %v32 = vld [vmem:[#allocation2 + $0x30] sm:$0x1]
    %v33 = vld [vmem:[#allocation2 + $0x38] sm:$0xff]
    %v34 = vld [vmem:[#allocation2 + $0x40] sm:$0xff]
    %v35 = vld [vmem:[#allocation2 + $0x48] sm:$0xff]
    %v36 = vld [vmem:[#allocation2 + $0x50] sm:$0xff]
    %v37 = vld [vmem:[#allocation2 + $0x58] sm:$0x1]
    %v38 = vld [vmem:[%s0] sm:$0xff]
    %v39 = vld [vmem:[%s0 + $0x8] sm:$0xff]
    %v40 = vld [vmem:[%s0 + $0x10] sm:$0xff]
    %v41 = vld [vmem:[%s0 + $0x18] sm:$0xff]
    %v42 = vld [vmem:[%s0 + $0x20] sm:$0xff]
    %v43 = vld [vmem:[%s0 + $0x28] sm:$0xff]
    %v44 = vld [vmem:[%s0 + $0x30] sm:$0xff]
    %v45 = vld [vmem:[%s0 + $0x38] sm:$0xff]
    %v46 = vlaneseq
    %v47 = vshrl.u32 %v46, 7
    %v48 = vsub.s32 0, %v47
    %v49 = vrot.slane %v32, %v48
    %vm50 = vcmask 130048
    %v52 = vsel %vm50, %v38, 0
    %v55 = vsel %vm50, %v39, 0
    %v58 = vsel %vm50, %v40, 0
    %v61 = vsel %vm50, %v41, 0
    %v64 = vsel %vm50, %v42, 0
    %v67 = vsel %vm50, %v43, 0
    %v70 = vsel %vm50, %v44, 0
    %v73 = vsel %vm50, %v45, 0
    %75 = vmatprep.subr.mxu0 0.0
    %76 = vmatpush1.msra.mxu0 %v26
    %77 = vmatprep.subr.mxu0 0.0
    %78 = vmatpush1.msra.mxu0 %v27
    %79 = vmatprep.subr.mxu0 0.0
    %80 = vmatpush1.msra.mxu0 0.0
    %81 = vmatprep.subr.mxu0 0.0
    %82 = vmatpush1.msra.mxu0 0.0
    %83 = vmatprep.subr.mxu0 0.0
    %84 = vmatpush1.msra.mxu0 0.0
    %85 = vmatprep.subr.mxu0 0.0
    %86 = vmatpush1.msra.mxu0 0.0
    %87 = vmatprep.subr.mxu0 0.0
    %88 = vmatpush1.msra.mxu0 0.0
    %89 = vmatprep.subr.mxu0 0.0
    %90 = vmatpush1.msra.mxu0 0.0
    %91 = vmatprep.subr.mxu0 0.0
    %92 = vmatpush1.msra.mxu0 0.0
    %93 = vmatprep.subr.mxu0 0.0
    %94 = vmatpush1.msra.mxu0 0.0
    %95 = vmatprep.subr.mxu0 0.0
    %96 = vmatpush1.msra.mxu0 0.0
    %97 = vmatprep.subr.mxu0 0.0
    %98 = vmatpush1.msra.mxu0 0.0
    %99 = vmatprep.subr.mxu0 0.0
    %100 = vmatpush1.msra.mxu0 0.0
    %101 = vmatprep.subr.mxu0 0.0
    %102 = vmatpush1.msra.mxu0 0.0
    %103 = vmatprep.subr.mxu0 0.0
    %104 = vmatpush1.msra.mxu0 0.0
    %105 = vmatprep.subr.mxu0 0.0
    %106 = vmatpush1.msra.mxu0 0.0
    %107 = vmatprep.subr.mxu0 0.0
    %108 = vmatpush1.msra.mxu0 0.0
    %109 = vmatprep.subr.mxu0 0.0
    %110 = vmatpush1.msra.mxu0 0.0
    %111 = vmatprep.subr.mxu0 0.0
    %112 = vmatpush1.msra.mxu0 0.0
    %113 = vmatprep.subr.mxu0 0.0
    %114 = vmatpush1.msra.mxu0 0.0
    %115 = vmatprep.subr.mxu0 0.0
    %116 = vmatpush1.msra.mxu0 0.0
    %117 = vmatprep.subr.mxu0 0.0
    %118 = vmatpush1.msra.mxu0 0.0
    %119 = vmatprep.subr.mxu0 0.0
    %120 = vmatpush1.msra.mxu0 0.0
    %121 = vmatprep.subr.mxu0 0.0
    %122 = vmatpush1.msra.mxu0 0.0
    %123 = vmatprep.subr.mxu0 0.0
    %124 = vmatpush1.msra.mxu0 0.0
    %125 = vmatprep.subr.mxu0 0.0
    %126 = vmatpush1.msra.mxu0 0.0
    %127 = vmatprep.subr.mxu0 0.0
    %128 = vmatpush1.msra.mxu0 0.0
    %129 = vmatprep.subr.mxu0 0.0
    %130 = vmatpush1.msra.mxu0 0.0
    %131 = vmatprep.subr.mxu0 0.0
    %132 = vmatpush1.msra.mxu0 0.0
    %133 = vmatprep.subr.mxu0 0.0
    %134 = vmatpush1.msra.mxu0 0.0
    %135 = vmatprep.subr.mxu0 0.0
    %136 = vmatpush1.msra.mxu0 0.0
    %137 = vmatprep.subr.mxu0 0.0
    %138 = vmatpush1.msra.mxu0 0.0
    %139 = vmatprep.mubr.f32.mxu0 0.0
    %140 = vmatmul.mubr.f32.gmra.mrb[0].mxu0 %v52
    %v141 = vpop.f32.mrb[0].mxu0
    %v142 = vadd.f32 %v49, %v141
    %v143 = vpop.f32.mrb[0].mxu0
    %144 = vmatprep.mubr.f32.mxu0 0.0
    %145 = vmatmul.mubr.f32.gmra.mrb[0].mxu0 %v55
    %v146 = vpop.f32.mrb[0].mxu0
    %v147 = vadd.f32 %v49, %v146
    %v148 = vpop.f32.mrb[0].mxu0
    %149 = vmatprep.mubr.f32.mxu0 0.0
    %150 = vmatmul.mubr.f32.gmra.mrb[0].mxu0 %v58
    %v151 = vpop.f32.mrb[0].mxu0
    %v152 = vadd.f32 %v49, %v151
    %v153 = vpop.f32.mrb[0].mxu0
    %154 = vmatprep.mubr.f32.mxu0 0.0
    %155 = vmatmul.mubr.f32.gmra.mrb[0].mxu0 %v61
    %v156 = vpop.f32.mrb[0].mxu0
    %v157 = vadd.f32 %v49, %v156
    %v158 = vpop.f32.mrb[0].mxu0
    %159 = vmatprep.mubr.f32.mxu0 0.0
    %160 = vmatmul.mubr.f32.gmra.mrb[0].mxu0 %v64
    %v161 = vpop.f32.mrb[0].mxu0
    %v162 = vadd.f32 %v49, %v161
    %v163 = vpop.f32.mrb[0].mxu0
    %164 = vmatprep.mubr.f32.mxu0 0.0
    %165 = vmatmul.mubr.f32.gmra.mrb[0].mxu0 %v67
    %v166 = vpop.f32.mrb[0].mxu0
    %v167 = vadd.f32 %v49, %v166
    %v168 = vpop.f32.mrb[0].mxu0
    %169 = vmatprep.mubr.f32.mxu0 0.0
    %170 = vmatmul.mubr.f32.gmra.mrb[0].mxu0 %v70
    %v171 = vpop.f32.mrb[0].mxu0
    %v172 = vadd.f32 %v49, %v171
    %v173 = vpop.f32.mrb[0].mxu0
    %174 = vmatprep.mubr.f32.mxu0 0.0
    %175 = vmatmul.mubr.f32.gmra.mrb[0].mxu0 %v73
    %v176 = vpop.f32.mrb[0].mxu0
    %v177 = vadd.f32 %v49, %v176
    %v178 = vpop.f32.mrb[0].mxu0
    %179 = vdwg.mxu0
    %vm180 = vcmask 261120
    %v182 = vsel %vm180, 0.0, 0
    %184 = vmatprep.subr.mxu0 0.0
    %185 = vmatpush1.msra.mxu0 %v28
    %186 = vmatprep.subr.mxu0 0.0
    %187 = vmatpush1.msra.mxu0 %v29
    %188 = vmatprep.subr.mxu0 0.0
    %189 = vmatpush1.msra.mxu0 %v30
    %190 = vmatprep.subr.mxu0 0.0
    %191 = vmatpush1.msra.mxu0 %v31
    %192 = vmatprep.subr.mxu0 0.0
    %193 = vmatpush1.msra.mxu0 0.0
    %194 = vmatprep.subr.mxu0 0.0
    %195 = vmatpush1.msra.mxu0 0.0
    %196 = vmatprep.subr.mxu0 0.0
    %197 = vmatpush1.msra.mxu0 0.0
    %198 = vmatprep.subr.mxu0 0.0
    %199 = vmatpush1.msra.mxu0 0.0
    %200 = vmatprep.subr.mxu0 0.0
    %201 = vmatpush1.msra.mxu0 0.0
    %202 = vmatprep.subr.mxu0 0.0
    %203 = vmatpush1.msra.mxu0 0.0
    %204 = vmatprep.subr.mxu0 0.0
    %205 = vmatpush1.msra.mxu0 0.0
    %206 = vmatprep.subr.mxu0 0.0
    %207 = vmatpush1.msra.mxu0 0.0
    %208 = vmatprep.subr.mxu0 0.0
    %209 = vmatpush1.msra.mxu0 0.0
    %210 = vmatprep.subr.mxu0 0.0
    %211 = vmatpush1.msra.mxu0 0.0
    %212 = vmatprep.subr.mxu0 0.0
    %213 = vmatpush1.msra.mxu0 0.0
    %214 = vmatprep.subr.mxu0 0.0
    %215 = vmatpush1.msra.mxu0 0.0
    %216 = vmatprep.subr.mxu0 0.0
    %217 = vmatpush1.msra.mxu0 0.0
    %218 = vmatprep.subr.mxu0 0.0
    %219 = vmatpush1.msra.mxu0 0.0
    %220 = vmatprep.subr.mxu0 0.0
    %221 = vmatpush1.msra.mxu0 0.0
    %222 = vmatprep.subr.mxu0 0.0
    %223 = vmatpush1.msra.mxu0 0.0
    %224 = vmatprep.subr.mxu0 0.0
    %225 = vmatpush1.msra.mxu0 0.0
    %226 = vmatprep.subr.mxu0 0.0
    %227 = vmatpush1.msra.mxu0 0.0
    %228 = vmatprep.subr.mxu0 0.0
    %229 = vmatpush1.msra.mxu0 0.0
    %230 = vmatprep.subr.mxu0 0.0
    %231 = vmatpush1.msra.mxu0 0.0
    %232 = vmatprep.subr.mxu0 0.0
    %233 = vmatpush1.msra.mxu0 0.0
    %234 = vmatprep.subr.mxu0 0.0
    %235 = vmatpush1.msra.mxu0 0.0
    %236 = vmatprep.subr.mxu0 0.0
    %237 = vmatpush1.msra.mxu0 0.0
    %238 = vmatprep.subr.mxu0 0.0
    %239 = vmatpush1.msra.mxu0 0.0
    %240 = vmatprep.subr.mxu0 0.0
    %241 = vmatpush1.msra.mxu0 0.0
    %242 = vmatprep.subr.mxu0 0.0
    %243 = vmatpush1.msra.mxu0 0.0
    %244 = vmatprep.subr.mxu0 0.0
    %245 = vmatpush1.msra.mxu0 0.0
    %246 = vmatprep.subr.mxu0 0.0
    %247 = vmatpush1.msra.mxu0 0.0
    %248 = vmatprep.mubr.f32.mxu0 0.0
    %249 = vmatmul.mubr.f32.gmra.mrb[0].mxu0 %v182
    %v250 = vpop.f32.mrb[0].mxu0
    %v251 = vadd.f32 0.0, %v250
    %v252 = vpop.f32.mrb[0].mxu0
    %253 = vdwg.mxu0
    %v254 = vadd.f32 %v142, %v251
    %v255 = vxor.u32 %v254, 2147483648
    %v256 = vmul.f32 %v255, 1.442695
    %v257 = vpow.pop %v256
    %v258 = vadd.f32 %v257, 1.0
    %v259 = vrcp.pop %v258
    %v260 = vmul.f32 1.0, %v259
    %v261 = vmul.f32 %v260, 2.0
    %v262 = vsub.f32 %v261, 1.0
    %v263 = vmul.f32 %v260, 0.0
    %265 = vrot.lane.b32.xlu0 %v262, 32
    %v266 = vpop.permute.xlu0 %265
    %v268 = vmul.f32 %v260, %v266
    %270 = vrot.lane.b32.xlu0 %v268, 32
    %v271 = vpop.permute.xlu0 %270
    %v273 = vadd.f32 %v263, %v271
    %v274 = vadd.f32 %v273, %v273
    %v275 = vxor.u32 %v274, 2147483648
    %v276 = vmul.f32 %v275, 1.442695
    %v277 = vpow.pop %v276
    %v278 = vadd.f32 %v277, 1.0
    %v279 = vrcp.pop %v278
    %v280 = vmul.f32 1.0, %v279
    %v281 = vmul.f32 %v280, 2.0
    %v282 = vsub.f32 %v281, 1.0
    %284 = vrot.lane.b32.xlu0 %v282, 32
    %v285 = vpop.permute.xlu0 %284
    %v287 = vmul.f32 %v260, %v285
    %v288 = vld [vmem:[#allocation2 + $0x60] sm:$0xff]
    %290 = vrot.lane.b32.xlu0 %v287, 64
    %v291 = vpop.permute.xlu0 %290
    %v293 = vmul.f32 %v288, %v291
    %v294 = vadd.f32 %v293, 0.0
    %v295 = vsel %vm180, %v291, 0
    %297 = vmatprep.subr.mxu0 0.0
    %298 = vmatpush1.msra.mxu0 %v28
    %299 = vmatprep.subr.mxu0 0.0
    %300 = vmatpush1.msra.mxu0 %v29
    %301 = vmatprep.subr.mxu0 0.0
    %302 = vmatpush1.msra.mxu0 %v30
    %303 = vmatprep.subr.mxu0 0.0
    %304 = vmatpush1.msra.mxu0 %v31
    %305 = vmatprep.subr.mxu0 0.0
    %306 = vmatpush1.msra.mxu0 0.0
    %307 = vmatprep.subr.mxu0 0.0
    %308 = vmatpush1.msra.mxu0 0.0
    %309 = vmatprep.subr.mxu0 0.0
    %310 = vmatpush1.msra.mxu0 0.0
    %311 = vmatprep.subr.mxu0 0.0
    %312 = vmatpush1.msra.mxu0 0.0
    %313 = vmatprep.subr.mxu0 0.0
    %314 = vmatpush1.msra.mxu0 0.0
    %315 = vmatprep.subr.mxu0 0.0
    %316 = vmatpush1.msra.mxu0 0.0
    %317 = vmatprep.subr.mxu0 0.0
    %318 = vmatpush1.msra.mxu0 0.0
    %319 = vmatprep.subr.mxu0 0.0
    %320 = vmatpush1.msra.mxu0 0.0
    %321 = vmatprep.subr.mxu0 0.0
    %322 = vmatpush1.msra.mxu0 0.0
    %323 = vmatprep.subr.mxu0 0.0
    %324 = vmatpush1.msra.mxu0 0.0
    %325 = vmatprep.subr.mxu0 0.0
    %326 = vmatpush1.msra.mxu0 0.0
    %327 = vmatprep.subr.mxu0 0.0
    %328 = vmatpush1.msra.mxu0 0.0
    %329 = vmatprep.subr.mxu0 0.0
    %330 = vmatpush1.msra.mxu0 0.0
    %331 = vmatprep.subr.mxu0 0.0
    %332 = vmatpush1.msra.mxu0 0.0
    %333 = vmatprep.subr.mxu0 0.0
    %334 = vmatpush1.msra.mxu0 0.0
    %335 = vmatprep.subr.mxu0 0.0
    %336 = vmatpush1.msra.mxu0 0.0
    %337 = vmatprep.subr.mxu0 0.0
    %338 = vmatpush1.msra.mxu0 0.0
    %339 = vmatprep.subr.mxu0 0.0
    %340 = vmatpush1.msra.mxu0 0.0
    %341 = vmatprep.subr.mxu0 0.0
    %342 = vmatpush1.msra.mxu0 0.0
    %343 = vmatprep.subr.mxu0 0.0
    %344 = vmatpush1.msra.mxu0 0.0
    %345 = vmatprep.subr.mxu0 0.0
    %346 = vmatpush1.msra.mxu0 0.0
    %347 = vmatprep.subr.mxu0 0.0
    %348 = vmatpush1.msra.mxu0 0.0
    %349 = vmatprep.subr.mxu0 0.0
    %350 = vmatpush1.msra.mxu0 0.0
    %351 = vmatprep.subr.mxu0 0.0
    %352 = vmatpush1.msra.mxu0 0.0
    %353 = vmatprep.subr.mxu0 0.0
    %354 = vmatpush1.msra.mxu0 0.0
    %355 = vmatprep.subr.mxu0 0.0
    %356 = vmatpush1.msra.mxu0 0.0
    %357 = vmatprep.subr.mxu0 0.0
    %358 = vmatpush1.msra.mxu0 0.0
    %359 = vmatprep.subr.mxu0 0.0
    %360 = vmatpush1.msra.mxu0 0.0
    %361 = vmatprep.mubr.f32.mxu0 0.0
    %362 = vmatmul.mubr.f32.gmra.mrb[0].mxu0 %v295
    %v363 = vpop.f32.mrb[0].mxu0
    %v364 = vadd.f32 0.0, %v363
    %v365 = vpop.f32.mrb[0].mxu0
    %366 = vdwg.mxu0
    %v367 = vadd.f32 %v147, %v364
    %v368 = vxor.u32 %v367, 2147483648
    %v369 = vmul.f32 %v368, 1.442695
    %v370 = vpow.pop %v369
    %v371 = vadd.f32 %v370, 1.0
    %v372 = vrcp.pop %v371
    %v373 = vmul.f32 1.0, %v372
    %v374 = vmul.f32 %v373, 2.0
    %v375 = vsub.f32 %v374, 1.0
    %v376 = vmul.f32 %v373, %v273
    %378 = vrot.lane.b32.xlu0 %v375, 32
    %v379 = vpop.permute.xlu0 %378
    %v381 = vmul.f32 %v373, %v379
    %383 = vrot.lane.b32.xlu0 %v381, 32
    %v384 = vpop.permute.xlu0 %383
    %v386 = vadd.f32 %v376, %v384
    %v387 = vadd.f32 %v386, %v386
    %v388 = vxor.u32 %v387, 2147483648
    %v389 = vmul.f32 %v388, 1.442695
    %v390 = vpow.pop %v389
    %v391 = vadd.f32 %v390, 1.0
    %v392 = vrcp.pop %v391
    %v393 = vmul.f32 1.0, %v392
    %v394 = vmul.f32 %v393, 2.0
    %v395 = vsub.f32 %v394, 1.0
    %397 = vrot.lane.b32.xlu0 %v395, 32
    %v398 = vpop.permute.xlu0 %397
    %v400 = vmul.f32 %v373, %v398
    %v401 = vld [vmem:[#allocation2 + $0x68] sm:$0xff]
    %403 = vrot.lane.b32.xlu0 %v294, 64
    %v404 = vpop.permute.xlu0 %403
    %v406 = vsub.f32 %v400, %v404
    %408 = vrot.lane.b32.xlu0 %v406, 64
    %v409 = vpop.permute.xlu0 %408
    %v411 = vmul.f32 %v401, %v409
    %v412 = vadd.f32 %v294, %v411
    %414 = vrot.lane.b32.xlu0 %v400, 64
    %v415 = vpop.permute.xlu0 %414
    %v416 = vsel %vm180, %v415, 0
    %418 = vmatprep.subr.mxu0 0.0
    %419 = vmatpush1.msra.mxu0 %v28
    %420 = vmatprep.subr.mxu0 0.0
    %421 = vmatpush1.msra.mxu0 %v29
    %422 = vmatprep.subr.mxu0 0.0
    %423 = vmatpush1.msra.mxu0 %v30
    %424 = vmatprep.subr.mxu0 0.0
    %425 = vmatpush1.msra.mxu0 %v31
    %426 = vmatprep.subr.mxu0 0.0
    %427 = vmatpush1.msra.mxu0 0.0
    %428 = vmatprep.subr.mxu0 0.0
    %429 = vmatpush1.msra.mxu0 0.0
    %430 = vmatprep.subr.mxu0 0.0
    %431 = vmatpush1.msra.mxu0 0.0
    %432 = vmatprep.subr.mxu0 0.0
    %433 = vmatpush1.msra.mxu0 0.0
    %434 = vmatprep.subr.mxu0 0.0
    %435 = vmatpush1.msra.mxu0 0.0
    %436 = vmatprep.subr.mxu0 0.0
    %437 = vmatpush1.msra.mxu0 0.0
    %438 = vmatprep.subr.mxu0 0.0
    %439 = vmatpush1.msra.mxu0 0.0
    %440 = vmatprep.subr.mxu0 0.0
    %441 = vmatpush1.msra.mxu0 0.0
    %442 = vmatprep.subr.mxu0 0.0
    %443 = vmatpush1.msra.mxu0 0.0
    %444 = vmatprep.subr.mxu0 0.0
    %445 = vmatpush1.msra.mxu0 0.0
    %446 = vmatprep.subr.mxu0 0.0
    %447 = vmatpush1.msra.mxu0 0.0
    %448 = vmatprep.subr.mxu0 0.0
    %449 = vmatpush1.msra.mxu0 0.0
    %450 = vmatprep.subr.mxu0 0.0
    %451 = vmatpush1.msra.mxu0 0.0
    %452 = vmatprep.subr.mxu0 0.0
    %453 = vmatpush1.msra.mxu0 0.0
    %454 = vmatprep.subr.mxu0 0.0
    %455 = vmatpush1.msra.mxu0 0.0
    %456 = vmatprep.subr.mxu0 0.0
    %457 = vmatpush1.msra.mxu0 0.0
    %458 = vmatprep.subr.mxu0 0.0
    %459 = vmatpush1.msra.mxu0 0.0
    %460 = vmatprep.subr.mxu0 0.0
    %461 = vmatpush1.msra.mxu0 0.0
    %462 = vmatprep.subr.mxu0 0.0
    %463 = vmatpush1.msra.mxu0 0.0
    %464 = vmatprep.subr.mxu0 0.0
    %465 = vmatpush1.msra.mxu0 0.0
    %466 = vmatprep.subr.mxu0 0.0
    %467 = vmatpush1.msra.mxu0 0.0
    %468 = vmatprep.subr.mxu0 0.0
    %469 = vmatpush1.msra.mxu0 0.0
    %470 = vmatprep.subr.mxu0 0.0
    %471 = vmatpush1.msra.mxu0 0.0
    %472 = vmatprep.subr.mxu0 0.0
    %473 = vmatpush1.msra.mxu0 0.0
    %474 = vmatprep.subr.mxu0 0.0
    %475 = vmatpush1.msra.mxu0 0.0
    %476 = vmatprep.subr.mxu0 0.0
    %477 = vmatpush1.msra.mxu0 0.0
    %478 = vmatprep.subr.mxu0 0.0
    %479 = vmatpush1.msra.mxu0 0.0
    %480 = vmatprep.subr.mxu0 0.0
    %481 = vmatpush1.msra.mxu0 0.0
    %482 = vmatprep.mubr.f32.mxu0 0.0
    %483 = vmatmul.mubr.f32.gmra.mrb[0].mxu0 %v416
    %v484 = vpop.f32.mrb[0].mxu0
    %v485 = vadd.f32 0.0, %v484
    %v486 = vpop.f32.mrb[0].mxu0
    %487 = vdwg.mxu0
    %v488 = vadd.f32 %v152, %v485
    %v489 = vxor.u32 %v488, 2147483648
    %v490 = vmul.f32 %v489, 1.442695
    %v491 = vpow.pop %v490
    %v492 = vadd.f32 %v491, 1.0
    %v493 = vrcp.pop %v492
    %v494 = vmul.f32 1.0, %v493
    %v495 = vmul.f32 %v494, 2.0
    %v496 = vsub.f32 %v495, 1.0
    %v497 = vmul.f32 %v494, %v386
    %499 = vrot.lane.b32.xlu0 %v496, 32
    %v500 = vpop.permute.xlu0 %499
    %v502 = vmul.f32 %v494, %v500
    %504 = vrot.lane.b32.xlu0 %v502, 32
    %v505 = vpop.permute.xlu0 %504
    %v507 = vadd.f32 %v497, %v505
    %v508 = vadd.f32 %v507, %v507
    %v509 = vxor.u32 %v508, 2147483648
    %v510 = vmul.f32 %v509, 1.442695
    %v511 = vpow.pop %v510
    %v512 = vadd.f32 %v511, 1.0
    %v513 = vrcp.pop %v512
    %v514 = vmul.f32 1.0, %v513
    %v515 = vmul.f32 %v514, 2.0
    %v516 = vsub.f32 %v515, 1.0
    %518 = vrot.lane.b32.xlu0 %v516, 32
    %v519 = vpop.permute.xlu0 %518
    %v521 = vmul.f32 %v494, %v519
    %v522 = vld [vmem:[#allocation2 + $0x70] sm:$0xff]
    %524 = vrot.lane.b32.xlu0 %v412, 64
    %v525 = vpop.permute.xlu0 %524
    %v527 = vsub.f32 %v521, %v525
    %529 = vrot.lane.b32.xlu0 %v527, 64
    %v530 = vpop.permute.xlu0 %529
    %v532 = vmul.f32 %v522, %v530
    %v533 = vadd.f32 %v412, %v532
    %535 = vrot.lane.b32.xlu0 %v521, 64
    %v536 = vpop.permute.xlu0 %535
    %v537 = vsel %vm180, %v536, 0
    %539 = vmatprep.subr.mxu0 0.0
    %540 = vmatpush1.msra.mxu0 %v28
    %541 = vmatprep.subr.mxu0 0.0
    %542 = vmatpush1.msra.mxu0 %v29
    %543 = vmatprep.subr.mxu0 0.0
    %544 = vmatpush1.msra.mxu0 %v30
    %545 = vmatprep.subr.mxu0 0.0
    %546 = vmatpush1.msra.mxu0 %v31
    %547 = vmatprep.subr.mxu0 0.0
    %548 = vmatpush1.msra.mxu0 0.0
    %549 = vmatprep.subr.mxu0 0.0
    %550 = vmatpush1.msra.mxu0 0.0
    %551 = vmatprep.subr.mxu0 0.0
    %552 = vmatpush1.msra.mxu0 0.0
    %553 = vmatprep.subr.mxu0 0.0
    %554 = vmatpush1.msra.mxu0 0.0
    %555 = vmatprep.subr.mxu0 0.0
    %556 = vmatpush1.msra.mxu0 0.0
    %557 = vmatprep.subr.mxu0 0.0
    %558 = vmatpush1.msra.mxu0 0.0
    %559 = vmatprep.subr.mxu0 0.0
    %560 = vmatpush1.msra.mxu0 0.0
    %561 = vmatprep.subr.mxu0 0.0
    %562 = vmatpush1.msra.mxu0 0.0
    %563 = vmatprep.subr.mxu0 0.0
    %564 = vmatpush1.msra.mxu0 0.0
    %565 = vmatprep.subr.mxu0 0.0
    %566 = vmatpush1.msra.mxu0 0.0
    %567 = vmatprep.subr.mxu0 0.0
    %568 = vmatpush1.msra.mxu0 0.0
    %569 = vmatprep.subr.mxu0 0.0
    %570 = vmatpush1.msra.mxu0 0.0
    %571 = vmatprep.subr.mxu0 0.0
    %572 = vmatpush1.msra.mxu0 0.0
    %573 = vmatprep.subr.mxu0 0.0
    %574 = vmatpush1.msra.mxu0 0.0
    %575 = vmatprep.subr.mxu0 0.0
    %576 = vmatpush1.msra.mxu0 0.0
    %577 = vmatprep.subr.mxu0 0.0
    %578 = vmatpush1.msra.mxu0 0.0
    %579 = vmatprep.subr.mxu0 0.0
    %580 = vmatpush1.msra.mxu0 0.0
    %581 = vmatprep.subr.mxu0 0.0
    %582 = vmatpush1.msra.mxu0 0.0
    %583 = vmatprep.subr.mxu0 0.0
    %584 = vmatpush1.msra.mxu0 0.0
    %585 = vmatprep.subr.mxu0 0.0
    %586 = vmatpush1.msra.mxu0 0.0
    %587 = vmatprep.subr.mxu0 0.0
    %588 = vmatpush1.msra.mxu0 0.0
    %589 = vmatprep.subr.mxu0 0.0
    %590 = vmatpush1.msra.mxu0 0.0
    %591 = vmatprep.subr.mxu0 0.0
    %592 = vmatpush1.msra.mxu0 0.0
    %593 = vmatprep.subr.mxu0 0.0
    %594 = vmatpush1.msra.mxu0 0.0
    %595 = vmatprep.subr.mxu0 0.0
    %596 = vmatpush1.msra.mxu0 0.0
    %597 = vmatprep.subr.mxu0 0.0
    %598 = vmatpush1.msra.mxu0 0.0
    %599 = vmatprep.subr.mxu0 0.0
    %600 = vmatpush1.msra.mxu0 0.0
    %601 = vmatprep.subr.mxu0 0.0
    %602 = vmatpush1.msra.mxu0 0.0
    %603 = vmatprep.mubr.f32.mxu0 0.0
    %604 = vmatmul.mubr.f32.gmra.mrb[0].mxu0 %v537
    %v605 = vpop.f32.mrb[0].mxu0
    %v606 = vadd.f32 0.0, %v605
    %v607 = vpop.f32.mrb[0].mxu0
    %608 = vdwg.mxu0
    %v609 = vadd.f32 %v157, %v606
    %v610 = vxor.u32 %v609, 2147483648
    %v611 = vmul.f32 %v610, 1.442695
    %v612 = vpow.pop %v611
    %v613 = vadd.f32 %v612, 1.0
    %v614 = vrcp.pop %v613
    %v615 = vmul.f32 1.0, %v614
    %v616 = vmul.f32 %v615, 2.0
    %v617 = vsub.f32 %v616, 1.0
    %v618 = vmul.f32 %v615, %v507
    %620 = vrot.lane.b32.xlu0 %v617, 32
    %v621 = vpop.permute.xlu0 %620
    %v623 = vmul.f32 %v615, %v621
    %625 = vrot.lane.b32.xlu0 %v623, 32
    %v626 = vpop.permute.xlu0 %625
    %v628 = vadd.f32 %v618, %v626
    %v629 = vadd.f32 %v628, %v628
    %v630 = vxor.u32 %v629, 2147483648
    %v631 = vmul.f32 %v630, 1.442695
    %v632 = vpow.pop %v631
    %v633 = vadd.f32 %v632, 1.0
    %v634 = vrcp.pop %v633
    %v635 = vmul.f32 1.0, %v634
    %v636 = vmul.f32 %v635, 2.0
    %v637 = vsub.f32 %v636, 1.0
    %639 = vrot.lane.b32.xlu0 %v637, 32
    %v640 = vpop.permute.xlu0 %639
    %v642 = vmul.f32 %v615, %v640
    %v643 = vld [vmem:[#allocation2 + $0x78] sm:$0xff]
    %645 = vrot.lane.b32.xlu0 %v533, 64
    %v646 = vpop.permute.xlu0 %645
    %v648 = vsub.f32 %v642, %v646
    %650 = vrot.lane.b32.xlu0 %v648, 64
    %v651 = vpop.permute.xlu0 %650
    %v653 = vmul.f32 %v643, %v651
    %v654 = vadd.f32 %v533, %v653
    %656 = vrot.lane.b32.xlu0 %v642, 64
    %v657 = vpop.permute.xlu0 %656
    %v658 = vsel %vm180, %v657, 0
    %660 = vmatprep.subr.mxu0 0.0
    %661 = vmatpush1.msra.mxu0 %v28
    %662 = vmatprep.subr.mxu0 0.0
    %663 = vmatpush1.msra.mxu0 %v29
    %664 = vmatprep.subr.mxu0 0.0
    %665 = vmatpush1.msra.mxu0 %v30
    %666 = vmatprep.subr.mxu0 0.0
    %667 = vmatpush1.msra.mxu0 %v31
    %668 = vmatprep.subr.mxu0 0.0
    %669 = vmatpush1.msra.mxu0 0.0
    %670 = vmatprep.subr.mxu0 0.0
    %671 = vmatpush1.msra.mxu0 0.0
    %672 = vmatprep.subr.mxu0 0.0
    %673 = vmatpush1.msra.mxu0 0.0
    %674 = vmatprep.subr.mxu0 0.0
    %675 = vmatpush1.msra.mxu0 0.0
    %676 = vmatprep.subr.mxu0 0.0
    %677 = vmatpush1.msra.mxu0 0.0
    %678 = vmatprep.subr.mxu0 0.0
    %679 = vmatpush1.msra.mxu0 0.0
    %680 = vmatprep.subr.mxu0 0.0
    %681 = vmatpush1.msra.mxu0 0.0
    %682 = vmatprep.subr.mxu0 0.0
    %683 = vmatpush1.msra.mxu0 0.0
    %684 = vmatprep.subr.mxu0 0.0
    %685 = vmatpush1.msra.mxu0 0.0
    %686 = vmatprep.subr.mxu0 0.0
    %687 = vmatpush1.msra.mxu0 0.0
    %688 = vmatprep.subr.mxu0 0.0
    %689 = vmatpush1.msra.mxu0 0.0
    %690 = vmatprep.subr.mxu0 0.0
    %691 = vmatpush1.msra.mxu0 0.0
    %692 = vmatprep.subr.mxu0 0.0
    %693 = vmatpush1.msra.mxu0 0.0
    %694 = vmatprep.subr.mxu0 0.0
    %695 = vmatpush1.msra.mxu0 0.0
    %696 = vmatprep.subr.mxu0 0.0
    %697 = vmatpush1.msra.mxu0 0.0
    %698 = vmatprep.subr.mxu0 0.0
    %699 = vmatpush1.msra.mxu0 0.0
    %700 = vmatprep.subr.mxu0 0.0
    %701 = vmatpush1.msra.mxu0 0.0
    %702 = vmatprep.subr.mxu0 0.0
    %703 = vmatpush1.msra.mxu0 0.0
    %704 = vmatprep.subr.mxu0 0.0
    %705 = vmatpush1.msra.mxu0 0.0
    %706 = vmatprep.subr.mxu0 0.0
    %707 = vmatpush1.msra.mxu0 0.0
    %708 = vmatprep.subr.mxu0 0.0
    %709 = vmatpush1.msra.mxu0 0.0
    %710 = vmatprep.subr.mxu0 0.0
    %711 = vmatpush1.msra.mxu0 0.0
    %712 = vmatprep.subr.mxu0 0.0
    %713 = vmatpush1.msra.mxu0 0.0
    %714 = vmatprep.subr.mxu0 0.0
    %715 = vmatpush1.msra.mxu0 0.0
    %716 = vmatprep.subr.mxu0 0.0
    %717 = vmatpush1.msra.mxu0 0.0
    %718 = vmatprep.subr.mxu0 0.0
    %719 = vmatpush1.msra.mxu0 0.0
    %720 = vmatprep.subr.mxu0 0.0
    %721 = vmatpush1.msra.mxu0 0.0
    %722 = vmatprep.subr.mxu0 0.0
    %723 = vmatpush1.msra.mxu0 0.0
    %724 = vmatprep.mubr.f32.mxu0 0.0
    %725 = vmatmul.mubr.f32.gmra.mrb[0].mxu0 %v658
    %v726 = vpop.f32.mrb[0].mxu0
    %v727 = vadd.f32 0.0, %v726
    %v728 = vpop.f32.mrb[0].mxu0
    %729 = vdwg.mxu0
    %v730 = vadd.f32 %v162, %v727
    %v731 = vxor.u32 %v730, 2147483648
    %v732 = vmul.f32 %v731, 1.442695
    %v733 = vpow.pop %v732
    %v734 = vadd.f32 %v733, 1.0
    %v735 = vrcp.pop %v734
    %v736 = vmul.f32 1.0, %v735
    %v737 = vmul.f32 %v736, 2.0
    %v738 = vsub.f32 %v737, 1.0
    %v739 = vmul.f32 %v736, %v628
    %741 = vrot.lane.b32.xlu0 %v738, 32
    %v742 = vpop.permute.xlu0 %741
    %v744 = vmul.f32 %v736, %v742
    %746 = vrot.lane.b32.xlu0 %v744, 32
    %v747 = vpop.permute.xlu0 %746
    %v749 = vadd.f32 %v739, %v747
    %v750 = vadd.f32 %v749, %v749
    %v751 = vxor.u32 %v750, 2147483648
    %v752 = vmul.f32 %v751, 1.442695
    %v753 = vpow.pop %v752
    %v754 = vadd.f32 %v753, 1.0
    %v755 = vrcp.pop %v754
    %v756 = vmul.f32 1.0, %v755
    %v757 = vmul.f32 %v756, 2.0
    %v758 = vsub.f32 %v757, 1.0
    %760 = vrot.lane.b32.xlu0 %v758, 32
    %v761 = vpop.permute.xlu0 %760
    %v763 = vmul.f32 %v736, %v761
    %v764 = vld [vmem:[#allocation2 + $0x80] sm:$0xff]
    %766 = vrot.lane.b32.xlu0 %v654, 64
    %v767 = vpop.permute.xlu0 %766
    %v769 = vsub.f32 %v763, %v767
    %771 = vrot.lane.b32.xlu0 %v769, 64
    %v772 = vpop.permute.xlu0 %771
    %v774 = vmul.f32 %v764, %v772
    %v775 = vadd.f32 %v654, %v774
    %777 = vrot.lane.b32.xlu0 %v763, 64
    %v778 = vpop.permute.xlu0 %777
    %v779 = vsel %vm180, %v778, 0
    %781 = vmatprep.subr.mxu0 0.0
    %782 = vmatpush1.msra.mxu0 %v28
    %783 = vmatprep.subr.mxu0 0.0
    %784 = vmatpush1.msra.mxu0 %v29
    %785 = vmatprep.subr.mxu0 0.0
    %786 = vmatpush1.msra.mxu0 %v30
    %787 = vmatprep.subr.mxu0 0.0
    %788 = vmatpush1.msra.mxu0 %v31
    %789 = vmatprep.subr.mxu0 0.0
    %790 = vmatpush1.msra.mxu0 0.0
    %791 = vmatprep.subr.mxu0 0.0
    %792 = vmatpush1.msra.mxu0 0.0
    %793 = vmatprep.subr.mxu0 0.0
    %794 = vmatpush1.msra.mxu0 0.0
    %795 = vmatprep.subr.mxu0 0.0
    %796 = vmatpush1.msra.mxu0 0.0
    %797 = vmatprep.subr.mxu0 0.0
    %798 = vmatpush1.msra.mxu0 0.0
    %799 = vmatprep.subr.mxu0 0.0
    %800 = vmatpush1.msra.mxu0 0.0
    %801 = vmatprep.subr.mxu0 0.0
    %802 = vmatpush1.msra.mxu0 0.0
    %803 = vmatprep.subr.mxu0 0.0
    %804 = vmatpush1.msra.mxu0 0.0
    %805 = vmatprep.subr.mxu0 0.0
    %806 = vmatpush1.msra.mxu0 0.0
    %807 = vmatprep.subr.mxu0 0.0
    %808 = vmatpush1.msra.mxu0 0.0
    %809 = vmatprep.subr.mxu0 0.0
    %810 = vmatpush1.msra.mxu0 0.0
    %811 = vmatprep.subr.mxu0 0.0
    %812 = vmatpush1.msra.mxu0 0.0
    %813 = vmatprep.subr.mxu0 0.0
    %814 = vmatpush1.msra.mxu0 0.0
    %815 = vmatprep.subr.mxu0 0.0
    %816 = vmatpush1.msra.mxu0 0.0
    %817 = vmatprep.subr.mxu0 0.0
    %818 = vmatpush1.msra.mxu0 0.0
    %819 = vmatprep.subr.mxu0 0.0
    %820 = vmatpush1.msra.mxu0 0.0
    %821 = vmatprep.subr.mxu0 0.0
    %822 = vmatpush1.msra.mxu0 0.0
    %823 = vmatprep.subr.mxu0 0.0
    %824 = vmatpush1.msra.mxu0 0.0
    %825 = vmatprep.subr.mxu0 0.0
    %826 = vmatpush1.msra.mxu0 0.0
    %827 = vmatprep.subr.mxu0 0.0
    %828 = vmatpush1.msra.mxu0 0.0
    %829 = vmatprep.subr.mxu0 0.0
    %830 = vmatpush1.msra.mxu0 0.0
    %831 = vmatprep.subr.mxu0 0.0
    %832 = vmatpush1.msra.mxu0 0.0
    %833 = vmatprep.subr.mxu0 0.0
    %834 = vmatpush1.msra.mxu0 0.0
    %835 = vmatprep.subr.mxu0 0.0
    %836 = vmatpush1.msra.mxu0 0.0
    %837 = vmatprep.subr.mxu0 0.0
    %838 = vmatpush1.msra.mxu0 0.0
    %839 = vmatprep.subr.mxu0 0.0
    %840 = vmatpush1.msra.mxu0 0.0
    %841 = vmatprep.subr.mxu0 0.0
    %842 = vmatpush1.msra.mxu0 0.0
    %843 = vmatprep.subr.mxu0 0.0
    %844 = vmatpush1.msra.mxu0 0.0
    %845 = vmatprep.mubr.f32.mxu0 0.0
    %846 = vmatmul.mubr.f32.gmra.mrb[0].mxu0 %v779
    %v847 = vpop.f32.mrb[0].mxu0
    %v848 = vadd.f32 0.0, %v847
    %v849 = vpop.f32.mrb[0].mxu0
    %850 = vdwg.mxu0
    %v851 = vadd.f32 %v167, %v848
    %v852 = vxor.u32 %v851, 2147483648
    %v853 = vmul.f32 %v852, 1.442695
    %v854 = vpow.pop %v853
    %v855 = vadd.f32 %v854, 1.0
    %v856 = vrcp.pop %v855
    %v857 = vmul.f32 1.0, %v856
    %v858 = vmul.f32 %v857, 2.0
    %v859 = vsub.f32 %v858, 1.0
    %v860 = vmul.f32 %v857, %v749
    %862 = vrot.lane.b32.xlu0 %v859, 32
    %v863 = vpop.permute.xlu0 %862
    %v865 = vmul.f32 %v857, %v863
    %867 = vrot.lane.b32.xlu0 %v865, 32
    %v868 = vpop.permute.xlu0 %867
    %v870 = vadd.f32 %v860, %v868
    %v871 = vadd.f32 %v870, %v870
    %v872 = vxor.u32 %v871, 2147483648
    %v873 = vmul.f32 %v872, 1.442695
    %v874 = vpow.pop %v873
    %v875 = vadd.f32 %v874, 1.0
    %v876 = vrcp.pop %v875
    %v877 = vmul.f32 1.0, %v876
    %v878 = vmul.f32 %v877, 2.0
    %v879 = vsub.f32 %v878, 1.0
    %881 = vrot.lane.b32.xlu0 %v879, 32
    %v882 = vpop.permute.xlu0 %881
    %v884 = vmul.f32 %v857, %v882
    %v885 = vld [vmem:[#allocation2 + $0x88] sm:$0xff]
    %887 = vrot.lane.b32.xlu0 %v775, 64
    %v888 = vpop.permute.xlu0 %887
    %v890 = vsub.f32 %v884, %v888
    %892 = vrot.lane.b32.xlu0 %v890, 64
    %v893 = vpop.permute.xlu0 %892
    %v895 = vmul.f32 %v885, %v893
    %v896 = vadd.f32 %v775, %v895
    %898 = vrot.lane.b32.xlu0 %v884, 64
    %v899 = vpop.permute.xlu0 %898
    %v900 = vsel %vm180, %v899, 0
    %902 = vmatprep.subr.mxu0 0.0
    %903 = vmatpush1.msra.mxu0 %v28
    %904 = vmatprep.subr.mxu0 0.0
    %905 = vmatpush1.msra.mxu0 %v29
    %906 = vmatprep.subr.mxu0 0.0
    %907 = vmatpush1.msra.mxu0 %v30
    %908 = vmatprep.subr.mxu0 0.0
    %909 = vmatpush1.msra.mxu0 %v31
    %910 = vmatprep.subr.mxu0 0.0
    %911 = vmatpush1.msra.mxu0 0.0
    %912 = vmatprep.subr.mxu0 0.0
    %913 = vmatpush1.msra.mxu0 0.0
    %914 = vmatprep.subr.mxu0 0.0
    %915 = vmatpush1.msra.mxu0 0.0
    %916 = vmatprep.subr.mxu0 0.0
    %917 = vmatpush1.msra.mxu0 0.0
    %918 = vmatprep.subr.mxu0 0.0
    %919 = vmatpush1.msra.mxu0 0.0
    %920 = vmatprep.subr.mxu0 0.0
    %921 = vmatpush1.msra.mxu0 0.0
    %922 = vmatprep.subr.mxu0 0.0
    %923 = vmatpush1.msra.mxu0 0.0
    %924 = vmatprep.subr.mxu0 0.0
    %925 = vmatpush1.msra.mxu0 0.0
    %926 = vmatprep.subr.mxu0 0.0
    %927 = vmatpush1.msra.mxu0 0.0
    %928 = vmatprep.subr.mxu0 0.0
    %929 = vmatpush1.msra.mxu0 0.0
    %930 = vmatprep.subr.mxu0 0.0
    %931 = vmatpush1.msra.mxu0 0.0
    %932 = vmatprep.subr.mxu0 0.0
    %933 = vmatpush1.msra.mxu0 0.0
    %934 = vmatprep.subr.mxu0 0.0
    %935 = vmatpush1.msra.mxu0 0.0
    %936 = vmatprep.subr.mxu0 0.0
    %937 = vmatpush1.msra.mxu0 0.0
    %938 = vmatprep.subr.mxu0 0.0
    %939 = vmatpush1.msra.mxu0 0.0
    %940 = vmatprep.subr.mxu0 0.0
    %941 = vmatpush1.msra.mxu0 0.0
    %942 = vmatprep.subr.mxu0 0.0
    %943 = vmatpush1.msra.mxu0 0.0
    %944 = vmatprep.subr.mxu0 0.0
    %945 = vmatpush1.msra.mxu0 0.0
    %946 = vmatprep.subr.mxu0 0.0
    %947 = vmatpush1.msra.mxu0 0.0
    %948 = vmatprep.subr.mxu0 0.0
    %949 = vmatpush1.msra.mxu0 0.0
    %950 = vmatprep.subr.mxu0 0.0
    %951 = vmatpush1.msra.mxu0 0.0
    %952 = vmatprep.subr.mxu0 0.0
    %953 = vmatpush1.msra.mxu0 0.0
    %954 = vmatprep.subr.mxu0 0.0
    %955 = vmatpush1.msra.mxu0 0.0
    %956 = vmatprep.subr.mxu0 0.0
    %957 = vmatpush1.msra.mxu0 0.0
    %958 = vmatprep.subr.mxu0 0.0
    %959 = vmatpush1.msra.mxu0 0.0
    %960 = vmatprep.subr.mxu0 0.0
    %961 = vmatpush1.msra.mxu0 0.0
    %962 = vmatprep.subr.mxu0 0.0
    %963 = vmatpush1.msra.mxu0 0.0
    %964 = vmatprep.subr.mxu0 0.0
    %965 = vmatpush1.msra.mxu0 0.0
    %966 = vmatprep.mubr.f32.mxu0 0.0
    %967 = vmatmul.mubr.f32.gmra.mrb[0].mxu0 %v900
    %v968 = vpop.f32.mrb[0].mxu0
    %v969 = vadd.f32 0.0, %v968
    %v970 = vpop.f32.mrb[0].mxu0
    %971 = vdwg.mxu0
    %v972 = vadd.f32 %v172, %v969
    %v973 = vxor.u32 %v972, 2147483648
    %v974 = vmul.f32 %v973, 1.442695
    %v975 = vpow.pop %v974
    %v976 = vadd.f32 %v975, 1.0
    %v977 = vrcp.pop %v976
    %v978 = vmul.f32 1.0, %v977
    %v979 = vmul.f32 %v978, 2.0
    %v980 = vsub.f32 %v979, 1.0
    %v981 = vmul.f32 %v978, %v870
    %983 = vrot.lane.b32.xlu0 %v980, 32
    %v984 = vpop.permute.xlu0 %983
    %v986 = vmul.f32 %v978, %v984
    %988 = vrot.lane.b32.xlu0 %v986, 32
    %v989 = vpop.permute.xlu0 %988
    %v991 = vadd.f32 %v981, %v989
    %v992 = vadd.f32 %v991, %v991
    %v993 = vxor.u32 %v992, 2147483648
    %v994 = vmul.f32 %v993, 1.442695
    %v995 = vpow.pop %v994
    %v996 = vadd.f32 %v995, 1.0
    %v997 = vrcp.pop %v996
    %v998 = vmul.f32 1.0, %v997
    %v999 = vmul.f32 %v998, 2.0
    %v1000 = vsub.f32 %v999, 1.0
    %1002 = vrot.lane.b32.xlu0 %v1000, 32
    %v1003 = vpop.permute.xlu0 %1002
    %v1005 = vmul.f32 %v978, %v1003
    %v1006 = vld [vmem:[#allocation2 + $0x90] sm:$0xff]
    %1008 = vrot.lane.b32.xlu0 %v896, 64
    %v1009 = vpop.permute.xlu0 %1008
    %v1011 = vsub.f32 %v1005, %v1009
    %1013 = vrot.lane.b32.xlu0 %v1011, 64
    %v1014 = vpop.permute.xlu0 %1013
    %v1016 = vmul.f32 %v1006, %v1014
    %v1017 = vadd.f32 %v896, %v1016
    %1019 = vrot.lane.b32.xlu0 %v1005, 64
    %v1020 = vpop.permute.xlu0 %1019
    %v1021 = vsel %vm180, %v1020, 0
    %1023 = vmatprep.subr.mxu0 0.0
    %1024 = vmatpush1.msra.mxu0 %v28
    %1025 = vmatprep.subr.mxu0 0.0
    %1026 = vmatpush1.msra.mxu0 %v29
    %1027 = vmatprep.subr.mxu0 0.0
    %1028 = vmatpush1.msra.mxu0 %v30
    %1029 = vmatprep.subr.mxu0 0.0
    %1030 = vmatpush1.msra.mxu0 %v31
    %1031 = vmatprep.subr.mxu0 0.0
    %1032 = vmatpush1.msra.mxu0 0.0
    %1033 = vmatprep.subr.mxu0 0.0
    %1034 = vmatpush1.msra.mxu0 0.0
    %1035 = vmatprep.subr.mxu0 0.0
    %1036 = vmatpush1.msra.mxu0 0.0
    %1037 = vmatprep.subr.mxu0 0.0
    %1038 = vmatpush1.msra.mxu0 0.0
    %1039 = vmatprep.subr.mxu0 0.0
    %1040 = vmatpush1.msra.mxu0 0.0
    %1041 = vmatprep.subr.mxu0 0.0
    %1042 = vmatpush1.msra.mxu0 0.0
    %1043 = vmatprep.subr.mxu0 0.0
    %1044 = vmatpush1.msra.mxu0 0.0
    %1045 = vmatprep.subr.mxu0 0.0
    %1046 = vmatpush1.msra.mxu0 0.0
    %1047 = vmatprep.subr.mxu0 0.0
    %1048 = vmatpush1.msra.mxu0 0.0
    %1049 = vmatprep.subr.mxu0 0.0
    %1050 = vmatpush1.msra.mxu0 0.0
    %1051 = vmatprep.subr.mxu0 0.0
    %1052 = vmatpush1.msra.mxu0 0.0
    %1053 = vmatprep.subr.mxu0 0.0
    %1054 = vmatpush1.msra.mxu0 0.0
    %1055 = vmatprep.subr.mxu0 0.0
    %1056 = vmatpush1.msra.mxu0 0.0
    %1057 = vmatprep.subr.mxu0 0.0
    %1058 = vmatpush1.msra.mxu0 0.0
    %1059 = vmatprep.subr.mxu0 0.0
    %1060 = vmatpush1.msra.mxu0 0.0
    %1061 = vmatprep.subr.mxu0 0.0
    %1062 = vmatpush1.msra.mxu0 0.0
    %1063 = vmatprep.subr.mxu0 0.0
    %1064 = vmatpush1.msra.mxu0 0.0
    %1065 = vmatprep.subr.mxu0 0.0
    %1066 = vmatpush1.msra.mxu0 0.0
    %1067 = vmatprep.subr.mxu0 0.0
    %1068 = vmatpush1.msra.mxu0 0.0
    %1069 = vmatprep.subr.mxu0 0.0
    %1070 = vmatpush1.msra.mxu0 0.0
    %1071 = vmatprep.subr.mxu0 0.0
    %1072 = vmatpush1.msra.mxu0 0.0
    %1073 = vmatprep.subr.mxu0 0.0
    %1074 = vmatpush1.msra.mxu0 0.0
    %1075 = vmatprep.subr.mxu0 0.0
    %1076 = vmatpush1.msra.mxu0 0.0
    %1077 = vmatprep.subr.mxu0 0.0
    %1078 = vmatpush1.msra.mxu0 0.0
    %1079 = vmatprep.subr.mxu0 0.0
    %1080 = vmatpush1.msra.mxu0 0.0
    %1081 = vmatprep.subr.mxu0 0.0
    %1082 = vmatpush1.msra.mxu0 0.0
    %1083 = vmatprep.subr.mxu0 0.0
    %1084 = vmatpush1.msra.mxu0 0.0
    %1085 = vmatprep.subr.mxu0 0.0
    %1086 = vmatpush1.msra.mxu0 0.0
    %1087 = vmatprep.mubr.f32.mxu0 0.0
    %1088 = vmatmul.mubr.f32.gmra.mrb[0].mxu0 %v1021
    %v1089 = vpop.f32.mrb[0].mxu0
    %v1090 = vadd.f32 0.0, %v1089
    %v1091 = vpop.f32.mrb[0].mxu0
    %1092 = vdwg.mxu0
    %v1093 = vadd.f32 %v177, %v1090
    %v1094 = vxor.u32 %v1093, 2147483648
    %v1095 = vmul.f32 %v1094, 1.442695
    %v1096 = vpow.pop %v1095
    %v1097 = vadd.f32 %v1096, 1.0
    %v1098 = vrcp.pop %v1097
    %v1099 = vmul.f32 1.0, %v1098
    %v1100 = vmul.f32 %v1099, 2.0
    %v1101 = vsub.f32 %v1100, 1.0
    %v1102 = vmul.f32 %v1099, %v991
    %1104 = vrot.lane.b32.xlu0 %v1101, 32
    %v1105 = vpop.permute.xlu0 %1104
    %v1107 = vmul.f32 %v1099, %v1105
    %1109 = vrot.lane.b32.xlu0 %v1107, 32
    %v1110 = vpop.permute.xlu0 %1109
    %v1112 = vadd.f32 %v1102, %v1110
    %v1113 = vadd.f32 %v1112, %v1112
    %v1114 = vxor.u32 %v1113, 2147483648
    %v1115 = vmul.f32 %v1114, 1.442695
    %v1116 = vpow.pop %v1115
    %v1117 = vadd.f32 %v1116, 1.0
    %v1118 = vrcp.pop %v1117
    %v1119 = vmul.f32 1.0, %v1118
    %v1120 = vmul.f32 %v1119, 2.0
    %v1121 = vsub.f32 %v1120, 1.0
    %1123 = vrot.lane.b32.xlu0 %v1121, 32
    %v1124 = vpop.permute.xlu0 %1123
    %v1126 = vmul.f32 %v1099, %v1124
    %v1127 = vld [vmem:[#allocation2 + $0x98] sm:$0xff]
    %1129 = vrot.lane.b32.xlu0 %v1017, 64
    %v1130 = vpop.permute.xlu0 %1129
    %v1132 = vsub.f32 %v1126, %v1130
    %1134 = vrot.lane.b32.xlu0 %v1132, 64
    %v1135 = vpop.permute.xlu0 %1134
    %v1137 = vmul.f32 %v1127, %v1135
    %v1138 = vadd.f32 %v1017, %v1137
    %v1139 = vmax.f32 %v1138, 0.0
    %v1140 = vlaneseq
    %v1141 = vshrl.u32 %v1140, 7
    %v1142 = vsub.s32 0, %v1141
    %v1143 = vrot.slane %v37, %v1142
    %v1145 = vsel %vm180, %v1139, 0
    %1147 = vmatprep.subr.mxu0 0.0
    %1148 = vmatpush1.msra.mxu0 %v33
    %1149 = vmatprep.subr.mxu0 0.0
    %1150 = vmatpush1.msra.mxu0 %v34
    %1151 = vmatprep.subr.mxu0 0.0
    %1152 = vmatpush1.msra.mxu0 %v35
    %1153 = vmatprep.subr.mxu0 0.0
    %1154 = vmatpush1.msra.mxu0 %v36
    %1155 = vmatprep.subr.mxu0 0.0
    %1156 = vmatpush1.msra.mxu0 0.0
    %1157 = vmatprep.subr.mxu0 0.0
    %1158 = vmatpush1.msra.mxu0 0.0
    %1159 = vmatprep.subr.mxu0 0.0
    %1160 = vmatpush1.msra.mxu0 0.0
    %1161 = vmatprep.subr.mxu0 0.0
    %1162 = vmatpush1.msra.mxu0 0.0
    %1163 = vmatprep.subr.mxu0 0.0
    %1164 = vmatpush1.msra.mxu0 0.0
    %1165 = vmatprep.subr.mxu0 0.0
    %1166 = vmatpush1.msra.mxu0 0.0
    %1167 = vmatprep.subr.mxu0 0.0
    %1168 = vmatpush1.msra.mxu0 0.0
    %1169 = vmatprep.subr.mxu0 0.0
    %1170 = vmatpush1.msra.mxu0 0.0
    %1171 = vmatprep.subr.mxu0 0.0
    %1172 = vmatpush1.msra.mxu0 0.0
    %1173 = vmatprep.subr.mxu0 0.0
    %1174 = vmatpush1.msra.mxu0 0.0
    %1175 = vmatprep.subr.mxu0 0.0
    %1176 = vmatpush1.msra.mxu0 0.0
    %1177 = vmatprep.subr.mxu0 0.0
    %1178 = vmatpush1.msra.mxu0 0.0
    %1179 = vmatprep.subr.mxu0 0.0
    %1180 = vmatpush1.msra.mxu0 0.0
    %1181 = vmatprep.subr.mxu0 0.0
    %1182 = vmatpush1.msra.mxu0 0.0
    %1183 = vmatprep.subr.mxu0 0.0
    %1184 = vmatpush1.msra.mxu0 0.0
    %1185 = vmatprep.subr.mxu0 0.0
    %1186 = vmatpush1.msra.mxu0 0.0
    %1187 = vmatprep.subr.mxu0 0.0
    %1188 = vmatpush1.msra.mxu0 0.0
    %1189 = vmatprep.subr.mxu0 0.0
    %1190 = vmatpush1.msra.mxu0 0.0
    %1191 = vmatprep.subr.mxu0 0.0
    %1192 = vmatpush1.msra.mxu0 0.0
    %1193 = vmatprep.subr.mxu0 0.0
    %1194 = vmatpush1.msra.mxu0 0.0
    %1195 = vmatprep.subr.mxu0 0.0
    %1196 = vmatpush1.msra.mxu0 0.0
    %1197 = vmatprep.subr.mxu0 0.0
    %1198 = vmatpush1.msra.mxu0 0.0
    %1199 = vmatprep.subr.mxu0 0.0
    %1200 = vmatpush1.msra.mxu0 0.0
    %1201 = vmatprep.subr.mxu0 0.0
    %1202 = vmatpush1.msra.mxu0 0.0
    %1203 = vmatprep.subr.mxu0 0.0
    %1204 = vmatpush1.msra.mxu0 0.0
    %1205 = vmatprep.subr.mxu0 0.0
    %1206 = vmatpush1.msra.mxu0 0.0
    %1207 = vmatprep.subr.mxu0 0.0
    %1208 = vmatpush1.msra.mxu0 0.0
    %1209 = vmatprep.subr.mxu0 0.0
    %1210 = vmatpush1.msra.mxu0 0.0
    %1211 = vmatprep.mubr.f32.mxu0 0.0
    %1212 = vmatmul.mubr.f32.gmra.mrb[0].mxu0 %v1145
    %v1213 = vpop.f32.mrb[0].mxu0
    %v1214 = vadd.f32 %v1143, %v1213
    %v1215 = vpop.f32.mrb[0].mxu0
    %1216 = vdwg.mxu0
    %1217 = vmax.xlane.f32.xlu0 %v1214
    %v1218 = vpop.xlane.xlu0 %1217
    %v1219 = vsub.f32 %v1214, %v1218
    %v1220 = vmul.f32 %v1219, 1.442695
    %v1221 = vpow.pop %v1220
    %1222 = vadd.xlane.f32.xlu0 %v1221
    %v1223 = vpop.xlane.xlu0 %1222
    %v1224 = vrcp.pop %v1223
    %v1225 = vmul.f32 %v1221, %v1224
    %1226 = vst [vmem:[#allocation5] sm:$0xff] %v1225
    // Predicated region
    $region14: #{tpu_custom_call.1} parent=1 // pred_check
      _
    $region15: #{tpu_custom_call.1} parent=1 // pred_check_branch
      %1228 = sbr.rel (0) target = $region17
    $region16: #{tpu_custom_call.1} parent=1 // pred_region
      %s1230 = ssub.s32 128, 128
      %1231 = vsyncadd [#allocation4], %s1230
      %s1233 = sshll.u32 [#allocation5], 4
      %s1234 = int_to_ptr.vmem [resolvable:$true] %s1233
      %1236 = dma.vmem_to_hbm [thread:$0]  %s1234, 128, %s2, [#allocation4]
    $region17: #{tpu_custom_call.1} parent=1 // pred_fallthru
      _
    // Predicated region
    $region18: #{tpu_custom_call.1} parent=1 // pred_check
      _
    $region19: #{tpu_custom_call.1} parent=1 // pred_check_branch
      %1238 = sbr.rel (0) target = $region21
    $region20: #{tpu_custom_call.1} parent=1 // pred_region
      %1239 = dma.done [#allocation4], 128
    $region21: #{tpu_custom_call.1} parent=1 // pred_fallthru
      _
    %1240 = vsyncpa [#allocation3], 1
    %1241 = vsyncpa [#allocation4], 1

</llo_original>
